<compile_context>
chip_gen: v6e
topology: v6e:2x2x1
jax: 0.10.0
libtpu: 0.0.40
codegen_flags: <defaults>
</compile_context>

<pallas_src>
import math

import jax
import jax.numpy as jnp
import numpy as np
from jax import lax
from jax.experimental import pallas as pl
from jax.experimental.pallas import tpu as pltpu

# ---------------------------------------------------------------------------
# Model hyper-parameters (small, consistent with the module's __init__)
# ---------------------------------------------------------------------------
LAYERS = 2          # LSTM layers
VOCAB = 12          # vocab_size
HIDDEN = 32         # hidden_size == emb_size
EMB = HIDDEN
LENGTH = 8          # seq length (source_length == length -> no reshape branch)
SOURCE_LENGTH = 8
MLP_LAYERS = 2
MLP_HIDDEN = 64
BATCH = 2
EPS = 1e-12         # F.normalize eps


# ---------------------------------------------------------------------------
# Pallas kernel: embedding + wavefront LSTM stack + normalize + MLP + sigmoid
# ---------------------------------------------------------------------------
def encoder_kernel(tok_ref, emb_ref, wcat_ref, b_ref,
                   w0_ref, b0_ref, w1_ref, b1_ref, wr_ref, br_ref,
                   out_ref, misc_ref):
    f32 = jnp.float32
    B, L = tok_ref.shape                       # candidate block x seq length
    V, H = emb_ref.shape                       # vocab x hidden
    n_layers = b_ref.shape[0]

    # ---- In-kernel embedding lookup: one-hot (L*B, V) @ (V, H) on the MXU ----
    tok = tok_ref[...]                                              # (B, L) int32
    iota_v = lax.broadcasted_iota(jnp.int32, (B, V), 1)
    onehot = jnp.concatenate(
        [(tok[:, t:t + 1] == iota_v).astype(f32) for t in range(L)], axis=0)
    seq2d = jnp.dot(onehot, emb_ref[...],
                    preferred_element_type=f32)                     # (L*B, H), time-major

    wcat = wcat_ref[...]                                            # (2H, n_layers*4H)
    # Bias broadcasts hoisted out of the wave loop.
    biases = [jnp.broadcast_to(b_ref[l:l + 1, :], (B, 4 * H)) for l in range(n_layers)]

    hs = [jnp.zeros((B, H), f32) for _ in range(n_layers)]
    cs = [jnp.zeros((B, H), f32) for _ in range(n_layers)]
    out_seq = [None] * L

    # ---- Layer-wavefront recurrence: ONE fused MXU push per wave ----
    # At wave w, layer l processes time step t = w - l; layer l's input is the
    # start-of-wave hidden state of layer l-1 (its step-(w-1) output).
    for w in range(L + n_layers - 1):
        active = [l for l in range(n_layers) if 0 <= w - l < L]
        rows = []
        for l in active:                       # read only start-of-wave states
            x_in = seq2d[w * B:(w + 1) * B, :] if l == 0 else hs[l - 1]
            rows.append(jnp.concatenate([x_in, hs[l]], axis=-1))    # (B, 2H)
        lhs = rows[0] if len(rows) == 1 else jnp.concatenate(rows, axis=0)
        g_all = jnp.dot(lhs, wcat, preferred_element_type=f32)      # (nact*B, n_layers*4H)

        new_h, new_c = {}, {}
        for idx, l in enumerate(active):
            # Useful block: rows idx*B (sublane multiple of 8), lanes l*4H (x128).
            gates = g_all[idx * B:(idx + 1) * B, l * 4 * H:(l + 1) * 4 * H] + biases[l]
            sig = jax.nn.sigmoid(gates)        # one EUP pass covers i, f, o
            i_g = sig[:, 0 * H:1 * H]
            f_g = sig[:, 1 * H:2 * H]
            o_g = sig[:, 3 * H:4 * H]
            g_g = jnp.tanh(gates[:, 2 * H:3 * H])
            c_nxt = f_g * cs[l] + i_g * g_g
            h_nxt = o_g * jnp.tanh(c_nxt)
            new_h[l], new_c[l] = h_nxt, c_nxt
            if l == n_layers - 1:
                out_seq[w - l] = h_nxt         # register-resident last-layer outputs
        for l in active:
            hs[l], cs[l] = new_h[l], new_c[l]

    # ---- Head: normalize / mean-pool / normalize / MLP / regressor ----
    outs = []
    pooled = jnp.zeros((B, H), f32)
    for h_t in out_seq:
        ssq = jnp.sum(h_t * h_t, axis=-1, keepdims=True)
        o_t = h_t * lax.rsqrt(jnp.maximum(ssq, EPS * EPS))   # == x / max(||x||, eps)
        outs.append(o_t)
        pooled = pooled + o_t
    out_ref[...] = jnp.concatenate(outs, axis=-1)            # (B, L*H) lane-dense

    pooled = pooled * (1.0 / L)                              # mean over time
    ssq2 = jnp.sum(pooled * pooled, axis=-1, keepdims=True)
    arch = pooled * lax.rsqrt(jnp.maximum(ssq2, EPS * EPS))

    # MLP (Linear + ReLU) x 2, then regressor + sigmoid (dropouts are identity).
    hm = jnp.maximum(
        jnp.dot(arch, w0_ref[...], preferred_element_type=f32) + b0_ref[...], 0.0)
    hm = jnp.maximum(
        jnp.dot(hm, w1_ref[...], preferred_element_type=f32) + b1_ref[...], 0.0)
    logit = jnp.dot(hm, wr_ref[...], preferred_element_type=f32) + br_ref[...]
    pred = jax.nn.sigmoid(logit)

    # Single lane-dense misc slab: [h_0 | h_1 | c_0 | c_1 | arch | pred | pad].
    pad_w = misc_ref.shape[1] - (2 * n_layers * H + H + 1)
    pieces = hs + cs + [arch, pred]
    if pad_w > 0:
        pieces.append(jnp.zeros((B, pad_w), f32))
    misc_ref[...] = jnp.concatenate(pieces, axis=-1)


# ---------------------------------------------------------------------------
# Wrapper: candidate-block grid over any number of NAS candidates
# ---------------------------------------------------------------------------
def _round_up(x, m):
    return ((x + m - 1) // m) * m


def encoder_darts_forward(tokens, kparams, *, block_b=None):
    """tokens: (N, L) int32 architecture token sequences (N candidates share the
    same weights).  kparams: output of pack_params().  Returns the same structure
    as EncoderDarts.forward (eval mode)."""
    N, L = tokens.shape
    V, H = kparams['emb'].shape
    n_layers = kparams['b'].shape[0]

    if block_b is None:
        # Fill the 8-sublane vreg at minimum; grow toward MXU row count with N.
        block_b = min(128, _round_up(N, 8))
    n_pad = _round_up(N, block_b)
    nb = n_pad // block_b
    if n_pad != N:
        tokens = jnp.pad(tokens, ((0, n_pad - N), (0, 0)))   # pad rows -> discarded

    misc_w = _round_up(2 * n_layers * H + H + 1, 128)
    const2 = lambda i: (0, 0)   # constant index map -> weights stay VMEM-resident

    grid_spec = pltpu.PrefetchScalarGridSpec(
        num_scalar_prefetch=0,
        grid=(nb,),
        in_specs=[
            pl.BlockSpec((block_b, L), lambda i: (i, 0)),    # tokens: per candidate block
            pl.BlockSpec(kparams['emb'].shape, const2),      # weights: constant maps
            pl.BlockSpec(kparams['w_cat'].shape, const2),
            pl.BlockSpec(kparams['b'].shape, const2),
            pl.BlockSpec(kparams['w0'].shape, const2),
            pl.BlockSpec(kparams['b0'].shape, const2),
            pl.BlockSpec(kparams['w1'].shape, const2),
            pl.BlockSpec(kparams['b1'].shape, const2),
            pl.BlockSpec(kparams['wr'].shape, const2),
            pl.BlockSpec(kparams['br'].shape, const2),
        ],
        out_specs=(
            pl.BlockSpec((block_b, L * H), lambda i: (i, 0)),
            pl.BlockSpec((block_b, misc_w), lambda i: (i, 0)),
        ),
    )

    out_wide, misc = pl.pallas_call(
        encoder_kernel,
        out_shape=(
            jax.ShapeDtypeStruct((n_pad, L * H), jnp.float32),     # encoder_outputs
            jax.ShapeDtypeStruct((n_pad, misc_w), jnp.float32),    # h_n|c_n|arch|pred|pad
        ),
        grid_spec=grid_spec,
        compiler_params=pltpu.CompilerParams(
            dimension_semantics=("parallel",)),   # shard candidate blocks over v7x's 2 TCs
    )(tokens, kparams['emb'], kparams['w_cat'], kparams['b'],
      kparams['w0'], kparams['b0'], kparams['w1'], kparams['b1'],
      kparams['wr'], kparams['br'])

    out_wide = out_wide[:N]
    misc = misc[:N]
    encoder_outputs = out_wide.reshape(N, L, H)
    h_n = misc[:, :n_layers * H].reshape(N, n_layers, H).transpose(1, 0, 2)
    c_n = misc[:, n_layers * H:2 * n_layers * H].reshape(N, n_layers, H).transpose(1, 0, 2)
    arch_emb = misc[:, 2 * n_layers * H:2 * n_layers * H + H]
    predict_value = misc[:, 2 * n_layers * H + H:2 * n_layers * H + H + 1]
    return encoder_outputs, (h_n, c_n), arch_emb, predict_value


# ---------------------------------------------------------------------------
# Deterministic parameter init (shapes match the PyTorch module) + kernel pack
# ---------------------------------------------------------------------------
def init_params(key):
    ks = jax.random.split(key, 12)
    s = 1.0 / math.sqrt(HIDDEN)
    sm = 1.0 / math.sqrt(MLP_HIDDEN)
    u = lambda k, shp, lim: jax.random.uniform(k, shp, jnp.float32, -lim, lim)
    return {
        # nn.Embedding(vocab, emb)
        'emb': jax.random.normal(ks[0], (VOCAB, EMB), jnp.float32) * 0.1,
        # nn.LSTM: W_ih / W_hh stored pre-transposed as (H, 4H), gate order i|f|g|o
        'wih': u(ks[1], (LAYERS, HIDDEN, 4 * HIDDEN), s),
        'whh': u(ks[2], (LAYERS, HIDDEN, 4 * HIDDEN), s),
        # combined bias b_ih + b_hh
        'b': u(ks[3], (LAYERS, 1, 4 * HIDDEN), s) + u(ks[4], (LAYERS, 1, 4 * HIDDEN), s),
        'w0': u(ks[5], (HIDDEN, MLP_HIDDEN), s),
        'b0': u(ks[6], (1, MLP_HIDDEN), s),
        'w1': u(ks[7], (MLP_HIDDEN, MLP_HIDDEN), sm),
        'b1': u(ks[8], (1, MLP_HIDDEN), sm),
        'wr': u(ks[9], (MLP_HIDDEN, 1), sm),
        'br': u(ks[10], (1, 1), sm),
    }


def pack_params(p):
    """One-time re-layout for the fused wavefront kernel: lane-block l of w_cat
    is [W_ih_l ; W_hh_l] (2H, 4H), so LHS [x|h] rows pick the right gates."""
    n_layers, H, _ = p['wih'].shape
    w_cat = jnp.concatenate(
        [jnp.concatenate([p['wih'][l], p['whh'][l]], axis=0) for l in range(n_layers)],
        axis=1)                                           # (2H, n_layers*4H)
    return {
        'emb': p['emb'],
        'w_cat': w_cat,
        'b': p['b'].reshape(n_layers, 4 * H),
        'w0': p['w0'], 'b0': p['b0'],
        'w1': p['w1'], 'b1': p['b1'],
        'wr': p['wr'], 'br': p['br'],
    }


# ---------------------------------------------------------------------------
# Pure-JAX reference (same math) for validation
# ---------------------------------------------------------------------------
def ref_forward(tokens, params):
    with jax.default_matmul_precision("highest"):
        emb = jnp.take(params['emb'], tokens, axis=0).astype(jnp.float32)
        B, L, H = emb.shape
        seq = emb
        hs, cs = [], []
        for layer in range(LAYERS):
            h = jnp.zeros((B, H), jnp.float32)
            c = jnp.zeros((B, H), jnp.float32)
            outs = []
            for t in range(L):
                gates = (seq[:, t, :] @ params['wih'][layer]
                         + h @ params['whh'][layer] + params['b'][layer])
                i_g = jax.nn.sigmoid(gates[:, 0 * H:1 * H])
                f_g = jax.nn.sigmoid(gates[:, 1 * H:2 * H])
                g_g = jnp.tanh(gates[:, 2 * H:3 * H])
                o_g = jax.nn.sigmoid(gates[:, 3 * H:4 * H])
                c = f_g * c + i_g * g_g
                h = o_g * jnp.tanh(c)
                outs.append(h)
            seq = jnp.stack(outs, axis=1)
            hs.append(h)
            cs.append(c)
        norm = jnp.sqrt(jnp.sum(seq * seq, axis=-1, keepdims=True))
        out = seq / jnp.maximum(norm, EPS)
        pooled = jnp.mean(out, axis=1)
        n2 = jnp.sqrt(jnp.sum(pooled * pooled, axis=-1, keepdims=True))
        arch = pooled / jnp.maximum(n2, EPS)
        hm = jnp.maximum(arch @ params['w0'] + params['b0'], 0.0)
        hm = jnp.maximum(hm @ params['w1'] + params['b1'], 0.0)
        pred = jax.nn.sigmoid(hm @ params['wr'] + params['br'])
        return out, (jnp.stack(hs), jnp.stack(cs)), arch, pred


if __name__ == "__main__":
    key = jax.random.PRNGKey(0)
    k_par, k_tok, k_big = jax.random.split(key, 3)
    params = init_params(k_par)
    kparams = pack_params(params)

    def check(got, want):
        for g, w in zip(jax.tree_util.tree_leaves(got), jax.tree_util.tree_leaves(want)):
            np.testing.assert_allclose(np.asarray(g), np.asarray(w), rtol=3e-4, atol=3e-5)

    # Small test at module-consistent shapes (batch=2, length=8, hidden=32).
    tokens = jax.random.randint(k_tok, (BATCH, LENGTH), 0, VOCAB, dtype=jnp.int32)
    got = jax.block_until_ready(encoder_darts_forward(tokens, kparams))
    check(got, ref_forward(tokens, params))

    # Batched NAS-scoring path: 13 candidates -> padded to 2 candidate blocks of
    # 8 rows on the "parallel" grid axis (exercises padding + multi-block grid).
    tokens_big = jax.random.randint(k_big, (13, LENGTH), 0, VOCAB, dtype=jnp.int32)
    got_big = jax.block_until_ready(encoder_darts_forward(tokens_big, kparams, block_b=8))
    check(got_big, ref_forward(tokens_big, params))

    print("KERNEL_OK")
</pallas_src>

<mosaic_0001>
module attributes {stable_mosaic.version = 11 : i64} {
  func.func @encoder_kernel(%arg0: i32, %arg1: memref<8x8xi32, #tpu.memory_space<vmem>>, %arg2: memref<12x32xf32, #tpu.memory_space<vmem>>, %arg3: memref<64x256xf32, #tpu.memory_space<vmem>>, %arg4: memref<2x128xf32, #tpu.memory_space<vmem>>, %arg5: memref<32x64xf32, #tpu.memory_space<vmem>>, %arg6: memref<1x64xf32, #tpu.memory_space<vmem>>, %arg7: memref<64x64xf32, #tpu.memory_space<vmem>>, %arg8: memref<1x64xf32, #tpu.memory_space<vmem>>, %arg9: memref<64x1xf32, #tpu.memory_space<vmem>>, %arg10: memref<1x1xf32, #tpu.memory_space<vmem>>, %arg11: memref<8x256xf32, #tpu.memory_space<vmem>>, %arg12: memref<8x256xf32, #tpu.memory_space<vmem>>) attributes {dimension_semantics = [#tpu.dimension_semantics<parallel>], iteration_bounds = array<i64: 1>, scalar_prefetch = 0 : i64, scratch_operands = 0 : i64, tpu.core_type = #tpu.core_type<tc>, window_params = [{transform_indices = @transform_0, window_bounds = array<i64: 8, 8>}, {pipeline_mode = #tpu.pipeline_mode<synchronous>, transform_indices = @transform_1, window_bounds = array<i64: 12, 32>}, {pipeline_mode = #tpu.pipeline_mode<synchronous>, transform_indices = @transform_2, window_bounds = array<i64: 64, 256>}, {pipeline_mode = #tpu.pipeline_mode<synchronous>, transform_indices = @transform_3, window_bounds = array<i64: 2, 128>}, {pipeline_mode = #tpu.pipeline_mode<synchronous>, transform_indices = @transform_4, window_bounds = array<i64: 32, 64>}, {pipeline_mode = #tpu.pipeline_mode<synchronous>, transform_indices = @transform_5, window_bounds = array<i64: 1, 64>}, {pipeline_mode = #tpu.pipeline_mode<synchronous>, transform_indices = @transform_6, window_bounds = array<i64: 64, 64>}, {pipeline_mode = #tpu.pipeline_mode<synchronous>, transform_indices = @transform_7, window_bounds = array<i64: 1, 64>}, {pipeline_mode = #tpu.pipeline_mode<synchronous>, transform_indices = @transform_8, window_bounds = array<i64: 64, 1>}, {pipeline_mode = #tpu.pipeline_mode<synchronous>, transform_indices = @transform_9, window_bounds = array<i64: 1, 1>}, {transform_indices = @transform_10, window_bounds = array<i64: 8, 256>}, {transform_indices = @transform_11, window_bounds = array<i64: 8, 256>}]} {
    %c0 = arith.constant 0 : index
    %c0_0 = arith.constant 0 : index
    %0 = vector.load %arg1[%c0, %c0_0] : memref<8x8xi32, #tpu.memory_space<vmem>>, vector<8x8xi32>
    %1 = tpu.iota {dimensions = array<i32: 1>} : vector<8x12xi32>
    %2 = vector.extract_strided_slice %0 {offsets = [0, 0], sizes = [8, 1], strides = [1, 1]} : vector<8x8xi32> to vector<8x1xi32>
    %3 = vector.broadcast %2 : vector<8x1xi32> to vector<8x12xi32>
    %4 = arith.cmpi eq, %3, %1 : vector<8x12xi32>
    %5 = arith.extui %4 : vector<8x12xi1> to vector<8x12xi32>
    %6 = arith.sitofp %5 : vector<8x12xi32> to vector<8x12xf32>
    %7 = vector.extract_strided_slice %0 {offsets = [0, 1], sizes = [8, 1], strides = [1, 1]} : vector<8x8xi32> to vector<8x1xi32>
    %8 = vector.broadcast %7 : vector<8x1xi32> to vector<8x12xi32>
    %9 = arith.cmpi eq, %8, %1 : vector<8x12xi32>
    %10 = arith.extui %9 : vector<8x12xi1> to vector<8x12xi32>
    %11 = arith.sitofp %10 : vector<8x12xi32> to vector<8x12xf32>
    %12 = vector.extract_strided_slice %0 {offsets = [0, 2], sizes = [8, 1], strides = [1, 1]} : vector<8x8xi32> to vector<8x1xi32>
    %13 = vector.broadcast %12 : vector<8x1xi32> to vector<8x12xi32>
    %14 = arith.cmpi eq, %13, %1 : vector<8x12xi32>
    %15 = arith.extui %14 : vector<8x12xi1> to vector<8x12xi32>
    %16 = arith.sitofp %15 : vector<8x12xi32> to vector<8x12xf32>
    %17 = vector.extract_strided_slice %0 {offsets = [0, 3], sizes = [8, 1], strides = [1, 1]} : vector<8x8xi32> to vector<8x1xi32>
    %18 = vector.broadcast %17 : vector<8x1xi32> to vector<8x12xi32>
    %19 = arith.cmpi eq, %18, %1 : vector<8x12xi32>
    %20 = arith.extui %19 : vector<8x12xi1> to vector<8x12xi32>
    %21 = arith.sitofp %20 : vector<8x12xi32> to vector<8x12xf32>
    %22 = vector.extract_strided_slice %0 {offsets = [0, 4], sizes = [8, 1], strides = [1, 1]} : vector<8x8xi32> to vector<8x1xi32>
    %23 = vector.broadcast %22 : vector<8x1xi32> to vector<8x12xi32>
    %24 = arith.cmpi eq, %23, %1 : vector<8x12xi32>
    %25 = arith.extui %24 : vector<8x12xi1> to vector<8x12xi32>
    %26 = arith.sitofp %25 : vector<8x12xi32> to vector<8x12xf32>
    %27 = vector.extract_strided_slice %0 {offsets = [0, 5], sizes = [8, 1], strides = [1, 1]} : vector<8x8xi32> to vector<8x1xi32>
    %28 = vector.broadcast %27 : vector<8x1xi32> to vector<8x12xi32>
    %29 = arith.cmpi eq, %28, %1 : vector<8x12xi32>
    %30 = arith.extui %29 : vector<8x12xi1> to vector<8x12xi32>
    %31 = arith.sitofp %30 : vector<8x12xi32> to vector<8x12xf32>
    %32 = vector.extract_strided_slice %0 {offsets = [0, 6], sizes = [8, 1], strides = [1, 1]} : vector<8x8xi32> to vector<8x1xi32>
    %33 = vector.broadcast %32 : vector<8x1xi32> to vector<8x12xi32>
    %34 = arith.cmpi eq, %33, %1 : vector<8x12xi32>
    %35 = arith.extui %34 : vector<8x12xi1> to vector<8x12xi32>
    %36 = arith.sitofp %35 : vector<8x12xi32> to vector<8x12xf32>
    %37 = vector.extract_strided_slice %0 {offsets = [0, 7], sizes = [8, 1], strides = [1, 1]} : vector<8x8xi32> to vector<8x1xi32>
    %38 = vector.broadcast %37 : vector<8x1xi32> to vector<8x12xi32>
    %39 = arith.cmpi eq, %38, %1 : vector<8x12xi32>
    %40 = arith.extui %39 : vector<8x12xi1> to vector<8x12xi32>
    %41 = arith.sitofp %40 : vector<8x12xi32> to vector<8x12xf32>
    %42 = tpu.concatenate %6, %11, %16, %21, %26, %31, %36, %41 in 0 : vector<8x12xf32>, vector<8x12xf32>, vector<8x12xf32>, vector<8x12xf32>, vector<8x12xf32>, vector<8x12xf32>, vector<8x12xf32>, vector<8x12xf32> -> vector<64x12xf32>
    %c0_1 = arith.constant 0 : index
    %c0_2 = arith.constant 0 : index
    %43 = vector.load %arg2[%c0_1, %c0_2] : memref<12x32xf32, #tpu.memory_space<vmem>>, vector<12x32xf32>
    %cst = arith.constant dense<0.000000e+00> : vector<64x32xf32>
    %44 = tpu.matmul %42, %43, %cst {dimension_numbers = #tpu.dot_dimension_numbers<[1], [0], [0], [1], [0, 0, 1, 1], [], []>} : vector<64x12xf32>, vector<12x32xf32>, vector<64x32xf32> -> vector<64x32xf32>
    %c0_3 = arith.constant 0 : index
    %c0_4 = arith.constant 0 : index
    %45 = vector.load %arg3[%c0_3, %c0_4] : memref<64x256xf32, #tpu.memory_space<vmem>>, vector<64x256xf32>
    %c0_5 = arith.constant 0 : index
    %c0_6 = arith.constant 0 : index
    %46 = vector.load %arg4[%c0_5, %c0_6] : memref<2x128xf32, #tpu.memory_space<vmem>>, vector<1x128xf32>
    %47 = vector.shape_cast %46 : vector<1x128xf32> to vector<1x128xf32>
    %48 = vector.broadcast %47 : vector<1x128xf32> to vector<8x128xf32>
    %c1 = arith.constant 1 : index
    %c0_7 = arith.constant 0 : index
    %49 = vector.load %arg4[%c1, %c0_7] : memref<2x128xf32, #tpu.memory_space<vmem>>, vector<1x128xf32>
    %50 = vector.shape_cast %49 : vector<1x128xf32> to vector<1x128xf32>
    %51 = vector.broadcast %50 : vector<1x128xf32> to vector<8x128xf32>
    %cst_8 = arith.constant 0.000000e+00 : f32
    %52 = vector.broadcast %cst_8 : f32 to vector<8x32xf32>
    %cst_9 = arith.constant 0.000000e+00 : f32
    %53 = vector.broadcast %cst_9 : f32 to vector<8x32xf32>
    %cst_10 = arith.constant 0.000000e+00 : f32
    %54 = vector.broadcast %cst_10 : f32 to vector<8x32xf32>
    %cst_11 = arith.constant 0.000000e+00 : f32
    %55 = vector.broadcast %cst_11 : f32 to vector<8x32xf32>
    %56 = vector.extract_strided_slice %44 {offsets = [0, 0], sizes = [8, 32], strides = [1, 1]} : vector<64x32xf32> to vector<8x32xf32>
    %57 = tpu.concatenate %56, %52 in 1 : vector<8x32xf32>, vector<8x32xf32> -> vector<8x64xf32>
    %cst_12 = arith.constant dense<0.000000e+00> : vector<8x256xf32>
    %58 = tpu.matmul %57, %45, %cst_12 {dimension_numbers = #tpu.dot_dimension_numbers<[1], [0], [0], [1], [0, 0, 1, 1], [], []>} : vector<8x64xf32>, vector<64x256xf32>, vector<8x256xf32> -> vector<8x256xf32>
    %59 = vector.extract_strided_slice %58 {offsets = [0, 0], sizes = [8, 128], strides = [1, 1]} : vector<8x256xf32> to vector<8x128xf32>
    %60 = arith.addf %59, %48 : vector<8x128xf32>
    %61 = arith.negf %60 : vector<8x128xf32>
    %62 = math.exp %61 : vector<8x128xf32>
    %cst_13 = arith.constant 1.000000e+00 : f32
    %63 = vector.broadcast %cst_13 : f32 to vector<8x128xf32>
    %64 = arith.addf %63, %62 : vector<8x128xf32>
    %65 = arith.divf %63, %64 : vector<8x128xf32>
    %66 = vector.extract_strided_slice %65 {offsets = [0, 0], sizes = [8, 32], strides = [1, 1]} : vector<8x128xf32> to vector<8x32xf32>
    %67 = vector.extract_strided_slice %65 {offsets = [0, 32], sizes = [8, 32], strides = [1, 1]} : vector<8x128xf32> to vector<8x32xf32>
    %68 = vector.extract_strided_slice %65 {offsets = [0, 96], sizes = [8, 32], strides = [1, 1]} : vector<8x128xf32> to vector<8x32xf32>
    %69 = vector.extract_strided_slice %60 {offsets = [0, 64], sizes = [8, 32], strides = [1, 1]} : vector<8x128xf32> to vector<8x32xf32>
    %70 = math.tanh %69 : vector<8x32xf32>
    %71 = arith.mulf %67, %54 : vector<8x32xf32>
    %72 = arith.mulf %66, %70 : vector<8x32xf32>
    %73 = arith.addf %71, %72 : vector<8x32xf32>
    %74 = math.tanh %73 : vector<8x32xf32>
    %75 = arith.mulf %68, %74 : vector<8x32xf32>
    %76 = vector.extract_strided_slice %44 {offsets = [8, 0], sizes = [8, 32], strides = [1, 1]} : vector<64x32xf32> to vector<8x32xf32>
    %77 = tpu.concatenate %76, %75 in 1 : vector<8x32xf32>, vector<8x32xf32> -> vector<8x64xf32>
    %78 = tpu.concatenate %75, %53 in 1 : vector<8x32xf32>, vector<8x32xf32> -> vector<8x64xf32>
    %79 = tpu.concatenate %77, %78 in 0 : vector<8x64xf32>, vector<8x64xf32> -> vector<16x64xf32>
    %cst_14 = arith.constant dense<0.000000e+00> : vector<16x256xf32>
    %80 = tpu.matmul %79, %45, %cst_14 {dimension_numbers = #tpu.dot_dimension_numbers<[1], [0], [0], [1], [0, 0, 1, 1], [], []>} : vector<16x64xf32>, vector<64x256xf32>, vector<16x256xf32> -> vector<16x256xf32>
    %81 = vector.extract_strided_slice %80 {offsets = [0, 0], sizes = [8, 128], strides = [1, 1]} : vector<16x256xf32> to vector<8x128xf32>
    %82 = arith.addf %81, %48 : vector<8x128xf32>
    %83 = arith.negf %82 : vector<8x128xf32>
    %84 = math.exp %83 : vector<8x128xf32>
    %cst_15 = arith.constant 1.000000e+00 : f32
    %85 = vector.broadcast %cst_15 : f32 to vector<8x128xf32>
    %86 = arith.addf %85, %84 : vector<8x128xf32>
    %87 = arith.divf %85, %86 : vector<8x128xf32>
    %88 = vector.extract_strided_slice %87 {offsets = [0, 0], sizes = [8, 32], strides = [1, 1]} : vector<8x128xf32> to vector<8x32xf32>
    %89 = vector.extract_strided_slice %87 {offsets = [0, 32], sizes = [8, 32], strides = [1, 1]} : vector<8x128xf32> to vector<8x32xf32>
    %90 = vector.extract_strided_slice %87 {offsets = [0, 96], sizes = [8, 32], strides = [1, 1]} : vector<8x128xf32> to vector<8x32xf32>
    %91 = vector.extract_strided_slice %82 {offsets = [0, 64], sizes = [8, 32], strides = [1, 1]} : vector<8x128xf32> to vector<8x32xf32>
    %92 = math.tanh %91 : vector<8x32xf32>
    %93 = arith.mulf %89, %73 : vector<8x32xf32>
    %94 = arith.mulf %88, %92 : vector<8x32xf32>
    %95 = arith.addf %93, %94 : vector<8x32xf32>
    %96 = math.tanh %95 : vector<8x32xf32>
    %97 = arith.mulf %90, %96 : vector<8x32xf32>
    %98 = vector.extract_strided_slice %80 {offsets = [8, 128], sizes = [8, 128], strides = [1, 1]} : vector<16x256xf32> to vector<8x128xf32>
    %99 = arith.addf %98, %51 : vector<8x128xf32>
    %100 = arith.negf %99 : vector<8x128xf32>
    %101 = math.exp %100 : vector<8x128xf32>
    %cst_16 = arith.constant 1.000000e+00 : f32
    %102 = vector.broadcast %cst_16 : f32 to vector<8x128xf32>
    %103 = arith.addf %102, %101 : vector<8x128xf32>
    %104 = arith.divf %102, %103 : vector<8x128xf32>
    %105 = vector.extract_strided_slice %104 {offsets = [0, 0], sizes = [8, 32], strides = [1, 1]} : vector<8x128xf32> to vector<8x32xf32>
    %106 = vector.extract_strided_slice %104 {offsets = [0, 32], sizes = [8, 32], strides = [1, 1]} : vector<8x128xf32> to vector<8x32xf32>
    %107 = vector.extract_strided_slice %104 {offsets = [0, 96], sizes = [8, 32], strides = [1, 1]} : vector<8x128xf32> to vector<8x32xf32>
    %108 = vector.extract_strided_slice %99 {offsets = [0, 64], sizes = [8, 32], strides = [1, 1]} : vector<8x128xf32> to vector<8x32xf32>
    %109 = math.tanh %108 : vector<8x32xf32>
    %110 = arith.mulf %106, %55 : vector<8x32xf32>
    %111 = arith.mulf %105, %109 : vector<8x32xf32>
    %112 = arith.addf %110, %111 : vector<8x32xf32>
    %113 = math.tanh %112 : vector<8x32xf32>
    %114 = arith.mulf %107, %113 : vector<8x32xf32>
    %115 = vector.extract_strided_slice %44 {offsets = [16, 0], sizes = [8, 32], strides = [1, 1]} : vector<64x32xf32> to vector<8x32xf32>
    %116 = tpu.concatenate %115, %97 in 1 : vector<8x32xf32>, vector<8x32xf32> -> vector<8x64xf32>
    %117 = tpu.concatenate %97, %114 in 1 : vector<8x32xf32>, vector<8x32xf32> -> vector<8x64xf32>
    %118 = tpu.concatenate %116, %117 in 0 : vector<8x64xf32>, vector<8x64xf32> -> vector<16x64xf32>
    %cst_17 = arith.constant dense<0.000000e+00> : vector<16x256xf32>
    %119 = tpu.matmul %118, %45, %cst_17 {dimension_numbers = #tpu.dot_dimension_numbers<[1], [0], [0], [1], [0, 0, 1, 1], [], []>} : vector<16x64xf32>, vector<64x256xf32>, vector<16x256xf32> -> vector<16x256xf32>
    %120 = vector.extract_strided_slice %119 {offsets = [0, 0], sizes = [8, 128], strides = [1, 1]} : vector<16x256xf32> to vector<8x128xf32>
    %121 = arith.addf %120, %48 : vector<8x128xf32>
    %122 = arith.negf %121 : vector<8x128xf32>
    %123 = math.exp %122 : vector<8x128xf32>
    %cst_18 = arith.constant 1.000000e+00 : f32
    %124 = vector.broadcast %cst_18 : f32 to vector<8x128xf32>
    %125 = arith.addf %124, %123 : vector<8x128xf32>
    %126 = arith.divf %124, %125 : vector<8x128xf32>
    %127 = vector.extract_strided_slice %126 {offsets = [0, 0], sizes = [8, 32], strides = [1, 1]} : vector<8x128xf32> to vector<8x32xf32>
    %128 = vector.extract_strided_slice %126 {offsets = [0, 32], sizes = [8, 32], strides = [1, 1]} : vector<8x128xf32> to vector<8x32xf32>
    %129 = vector.extract_strided_slice %126 {offsets = [0, 96], sizes = [8, 32], strides = [1, 1]} : vector<8x128xf32> to vector<8x32xf32>
    %130 = vector.extract_strided_slice %121 {offsets = [0, 64], sizes = [8, 32], strides = [1, 1]} : vector<8x128xf32> to vector<8x32xf32>
    %131 = math.tanh %130 : vector<8x32xf32>
    %132 = arith.mulf %128, %95 : vector<8x32xf32>
    %133 = arith.mulf %127, %131 : vector<8x32xf32>
    %134 = arith.addf %132, %133 : vector<8x32xf32>
    %135 = math.tanh %134 : vector<8x32xf32>
    %136 = arith.mulf %129, %135 : vector<8x32xf32>
    %137 = vector.extract_strided_slice %119 {offsets = [8, 128], sizes = [8, 128], strides = [1, 1]} : vector<16x256xf32> to vector<8x128xf32>
    %138 = arith.addf %137, %51 : vector<8x128xf32>
    %139 = arith.negf %138 : vector<8x128xf32>
    %140 = math.exp %139 : vector<8x128xf32>
    %cst_19 = arith.constant 1.000000e+00 : f32
    %141 = vector.broadcast %cst_19 : f32 to vector<8x128xf32>
    %142 = arith.addf %141, %140 : vector<8x128xf32>
    %143 = arith.divf %141, %142 : vector<8x128xf32>
    %144 = vector.extract_strided_slice %143 {offsets = [0, 0], sizes = [8, 32], strides = [1, 1]} : vector<8x128xf32> to vector<8x32xf32>
    %145 = vector.extract_strided_slice %143 {offsets = [0, 32], sizes = [8, 32], strides = [1, 1]} : vector<8x128xf32> to vector<8x32xf32>
    %146 = vector.extract_strided_slice %143 {offsets = [0, 96], sizes = [8, 32], strides = [1, 1]} : vector<8x128xf32> to vector<8x32xf32>
    %147 = vector.extract_strided_slice %138 {offsets = [0, 64], sizes = [8, 32], strides = [1, 1]} : vector<8x128xf32> to vector<8x32xf32>
    %148 = math.tanh %147 : vector<8x32xf32>
    %149 = arith.mulf %145, %112 : vector<8x32xf32>
    %150 = arith.mulf %144, %148 : vector<8x32xf32>
    %151 = arith.addf %149, %150 : vector<8x32xf32>
    %152 = math.tanh %151 : vector<8x32xf32>
    %153 = arith.mulf %146, %152 : vector<8x32xf32>
    %154 = vector.extract_strided_slice %44 {offsets = [24, 0], sizes = [8, 32], strides = [1, 1]} : vector<64x32xf32> to vector<8x32xf32>
    %155 = tpu.concatenate %154, %136 in 1 : vector<8x32xf32>, vector<8x32xf32> -> vector<8x64xf32>
    %156 = tpu.concatenate %136, %153 in 1 : vector<8x32xf32>, vector<8x32xf32> -> vector<8x64xf32>
    %157 = tpu.concatenate %155, %156 in 0 : vector<8x64xf32>, vector<8x64xf32> -> vector<16x64xf32>
    %cst_20 = arith.constant dense<0.000000e+00> : vector<16x256xf32>
    %158 = tpu.matmul %157, %45, %cst_20 {dimension_numbers = #tpu.dot_dimension_numbers<[1], [0], [0], [1], [0, 0, 1, 1], [], []>} : vector<16x64xf32>, vector<64x256xf32>, vector<16x256xf32> -> vector<16x256xf32>
    %159 = vector.extract_strided_slice %158 {offsets = [0, 0], sizes = [8, 128], strides = [1, 1]} : vector<16x256xf32> to vector<8x128xf32>
    %160 = arith.addf %159, %48 : vector<8x128xf32>
    %161 = arith.negf %160 : vector<8x128xf32>
    %162 = math.exp %161 : vector<8x128xf32>
    %cst_21 = arith.constant 1.000000e+00 : f32
    %163 = vector.broadcast %cst_21 : f32 to vector<8x128xf32>
    %164 = arith.addf %163, %162 : vector<8x128xf32>
    %165 = arith.divf %163, %164 : vector<8x128xf32>
    %166 = vector.extract_strided_slice %165 {offsets = [0, 0], sizes = [8, 32], strides = [1, 1]} : vector<8x128xf32> to vector<8x32xf32>
    %167 = vector.extract_strided_slice %165 {offsets = [0, 32], sizes = [8, 32], strides = [1, 1]} : vector<8x128xf32> to vector<8x32xf32>
    %168 = vector.extract_strided_slice %165 {offsets = [0, 96], sizes = [8, 32], strides = [1, 1]} : vector<8x128xf32> to vector<8x32xf32>
    %169 = vector.extract_strided_slice %160 {offsets = [0, 64], sizes = [8, 32], strides = [1, 1]} : vector<8x128xf32> to vector<8x32xf32>
    %170 = math.tanh %169 : vector<8x32xf32>
    %171 = arith.mulf %167, %134 : vector<8x32xf32>
    %172 = arith.mulf %166, %170 : vector<8x32xf32>
    %173 = arith.addf %171, %172 : vector<8x32xf32>
    %174 = math.tanh %173 : vector<8x32xf32>
    %175 = arith.mulf %168, %174 : vector<8x32xf32>
    %176 = vector.extract_strided_slice %158 {offsets = [8, 128], sizes = [8, 128], strides = [1, 1]} : vector<16x256xf32> to vector<8x128xf32>
    %177 = arith.addf %176, %51 : vector<8x128xf32>
    %178 = arith.negf %177 : vector<8x128xf32>
    %179 = math.exp %178 : vector<8x128xf32>
    %cst_22 = arith.constant 1.000000e+00 : f32
    %180 = vector.broadcast %cst_22 : f32 to vector<8x128xf32>
    %181 = arith.addf %180, %179 : vector<8x128xf32>
    %182 = arith.divf %180, %181 : vector<8x128xf32>
    %183 = vector.extract_strided_slice %182 {offsets = [0, 0], sizes = [8, 32], strides = [1, 1]} : vector<8x128xf32> to vector<8x32xf32>
    %184 = vector.extract_strided_slice %182 {offsets = [0, 32], sizes = [8, 32], strides = [1, 1]} : vector<8x128xf32> to vector<8x32xf32>
    %185 = vector.extract_strided_slice %182 {offsets = [0, 96], sizes = [8, 32], strides = [1, 1]} : vector<8x128xf32> to vector<8x32xf32>
    %186 = vector.extract_strided_slice %177 {offsets = [0, 64], sizes = [8, 32], strides = [1, 1]} : vector<8x128xf32> to vector<8x32xf32>
    %187 = math.tanh %186 : vector<8x32xf32>
    %188 = arith.mulf %184, %151 : vector<8x32xf32>
    %189 = arith.mulf %183, %187 : vector<8x32xf32>
    %190 = arith.addf %188, %189 : vector<8x32xf32>
    %191 = math.tanh %190 : vector<8x32xf32>
    %192 = arith.mulf %185, %191 : vector<8x32xf32>
    %193 = vector.extract_strided_slice %44 {offsets = [32, 0], sizes = [8, 32], strides = [1, 1]} : vector<64x32xf32> to vector<8x32xf32>
    %194 = tpu.concatenate %193, %175 in 1 : vector<8x32xf32>, vector<8x32xf32> -> vector<8x64xf32>
    %195 = tpu.concatenate %175, %192 in 1 : vector<8x32xf32>, vector<8x32xf32> -> vector<8x64xf32>
    %196 = tpu.concatenate %194, %195 in 0 : vector<8x64xf32>, vector<8x64xf32> -> vector<16x64xf32>
    %cst_23 = arith.constant dense<0.000000e+00> : vector<16x256xf32>
    %197 = tpu.matmul %196, %45, %cst_23 {dimension_numbers = #tpu.dot_dimension_numbers<[1], [0], [0], [1], [0, 0, 1, 1], [], []>} : vector<16x64xf32>, vector<64x256xf32>, vector<16x256xf32> -> vector<16x256xf32>
    %198 = vector.extract_strided_slice %197 {offsets = [0, 0], sizes = [8, 128], strides = [1, 1]} : vector<16x256xf32> to vector<8x128xf32>
    %199 = arith.addf %198, %48 : vector<8x128xf32>
    %200 = arith.negf %199 : vector<8x128xf32>
    %201 = math.exp %200 : vector<8x128xf32>
    %cst_24 = arith.constant 1.000000e+00 : f32
    %202 = vector.broadcast %cst_24 : f32 to vector<8x128xf32>
    %203 = arith.addf %202, %201 : vector<8x128xf32>
    %204 = arith.divf %202, %203 : vector<8x128xf32>
    %205 = vector.extract_strided_slice %204 {offsets = [0, 0], sizes = [8, 32], strides = [1, 1]} : vector<8x128xf32> to vector<8x32xf32>
    %206 = vector.extract_strided_slice %204 {offsets = [0, 32], sizes = [8, 32], strides = [1, 1]} : vector<8x128xf32> to vector<8x32xf32>
    %207 = vector.extract_strided_slice %204 {offsets = [0, 96], sizes = [8, 32], strides = [1, 1]} : vector<8x128xf32> to vector<8x32xf32>
    %208 = vector.extract_strided_slice %199 {offsets = [0, 64], sizes = [8, 32], strides = [1, 1]} : vector<8x128xf32> to vector<8x32xf32>
    %209 = math.tanh %208 : vector<8x32xf32>
    %210 = arith.mulf %206, %173 : vector<8x32xf32>
    %211 = arith.mulf %205, %209 : vector<8x32xf32>
    %212 = arith.addf %210, %211 : vector<8x32xf32>
    %213 = math.tanh %212 : vector<8x32xf32>
    %214 = arith.mulf %207, %213 : vector<8x32xf32>
    %215 = vector.extract_strided_slice %197 {offsets = [8, 128], sizes = [8, 128], strides = [1, 1]} : vector<16x256xf32> to vector<8x128xf32>
    %216 = arith.addf %215, %51 : vector<8x128xf32>
    %217 = arith.negf %216 : vector<8x128xf32>
    %218 = math.exp %217 : vector<8x128xf32>
    %cst_25 = arith.constant 1.000000e+00 : f32
    %219 = vector.broadcast %cst_25 : f32 to vector<8x128xf32>
    %220 = arith.addf %219, %218 : vector<8x128xf32>
    %221 = arith.divf %219, %220 : vector<8x128xf32>
    %222 = vector.extract_strided_slice %221 {offsets = [0, 0], sizes = [8, 32], strides = [1, 1]} : vector<8x128xf32> to vector<8x32xf32>
    %223 = vector.extract_strided_slice %221 {offsets = [0, 32], sizes = [8, 32], strides = [1, 1]} : vector<8x128xf32> to vector<8x32xf32>
    %224 = vector.extract_strided_slice %221 {offsets = [0, 96], sizes = [8, 32], strides = [1, 1]} : vector<8x128xf32> to vector<8x32xf32>
    %225 = vector.extract_strided_slice %216 {offsets = [0, 64], sizes = [8, 32], strides = [1, 1]} : vector<8x128xf32> to vector<8x32xf32>
    %226 = math.tanh %225 : vector<8x32xf32>
    %227 = arith.mulf %223, %190 : vector<8x32xf32>
    %228 = arith.mulf %222, %226 : vector<8x32xf32>
    %229 = arith.addf %227, %228 : vector<8x32xf32>
    %230 = math.tanh %229 : vector<8x32xf32>
    %231 = arith.mulf %224, %230 : vector<8x32xf32>
    %232 = vector.extract_strided_slice %44 {offsets = [40, 0], sizes = [8, 32], strides = [1, 1]} : vector<64x32xf32> to vector<8x32xf32>
    %233 = tpu.concatenate %232, %214 in 1 : vector<8x32xf32>, vector<8x32xf32> -> vector<8x64xf32>
    %234 = tpu.concatenate %214, %231 in 1 : vector<8x32xf32>, vector<8x32xf32> -> vector<8x64xf32>
    %235 = tpu.concatenate %233, %234 in 0 : vector<8x64xf32>, vector<8x64xf32> -> vector<16x64xf32>
    %cst_26 = arith.constant dense<0.000000e+00> : vector<16x256xf32>
    %236 = tpu.matmul %235, %45, %cst_26 {dimension_numbers = #tpu.dot_dimension_numbers<[1], [0], [0], [1], [0, 0, 1, 1], [], []>} : vector<16x64xf32>, vector<64x256xf32>, vector<16x256xf32> -> vector<16x256xf32>
    %237 = vector.extract_strided_slice %236 {offsets = [0, 0], sizes = [8, 128], strides = [1, 1]} : vector<16x256xf32> to vector<8x128xf32>
    %238 = arith.addf %237, %48 : vector<8x128xf32>
    %239 = arith.negf %238 : vector<8x128xf32>
    %240 = math.exp %239 : vector<8x128xf32>
    %cst_27 = arith.constant 1.000000e+00 : f32
    %241 = vector.broadcast %cst_27 : f32 to vector<8x128xf32>
    %242 = arith.addf %241, %240 : vector<8x128xf32>
    %243 = arith.divf %241, %242 : vector<8x128xf32>
    %244 = vector.extract_strided_slice %243 {offsets = [0, 0], sizes = [8, 32], strides = [1, 1]} : vector<8x128xf32> to vector<8x32xf32>
    %245 = vector.extract_strided_slice %243 {offsets = [0, 32], sizes = [8, 32], strides = [1, 1]} : vector<8x128xf32> to vector<8x32xf32>
    %246 = vector.extract_strided_slice %243 {offsets = [0, 96], sizes = [8, 32], strides = [1, 1]} : vector<8x128xf32> to vector<8x32xf32>
    %247 = vector.extract_strided_slice %238 {offsets = [0, 64], sizes = [8, 32], strides = [1, 1]} : vector<8x128xf32> to vector<8x32xf32>
    %248 = math.tanh %247 : vector<8x32xf32>
    %249 = arith.mulf %245, %212 : vector<8x32xf32>
    %250 = arith.mulf %244, %248 : vector<8x32xf32>
    %251 = arith.addf %249, %250 : vector<8x32xf32>
    %252 = math.tanh %251 : vector<8x32xf32>
    %253 = arith.mulf %246, %252 : vector<8x32xf32>
    %254 = vector.extract_strided_slice %236 {offsets = [8, 128], sizes = [8, 128], strides = [1, 1]} : vector<16x256xf32> to vector<8x128xf32>
    %255 = arith.addf %254, %51 : vector<8x128xf32>
    %256 = arith.negf %255 : vector<8x128xf32>
    %257 = math.exp %256 : vector<8x128xf32>
    %cst_28 = arith.constant 1.000000e+00 : f32
    %258 = vector.broadcast %cst_28 : f32 to vector<8x128xf32>
    %259 = arith.addf %258, %257 : vector<8x128xf32>
    %260 = arith.divf %258, %259 : vector<8x128xf32>
    %261 = vector.extract_strided_slice %260 {offsets = [0, 0], sizes = [8, 32], strides = [1, 1]} : vector<8x128xf32> to vector<8x32xf32>
    %262 = vector.extract_strided_slice %260 {offsets = [0, 32], sizes = [8, 32], strides = [1, 1]} : vector<8x128xf32> to vector<8x32xf32>
    %263 = vector.extract_strided_slice %260 {offsets = [0, 96], sizes = [8, 32], strides = [1, 1]} : vector<8x128xf32> to vector<8x32xf32>
    %264 = vector.extract_strided_slice %255 {offsets = [0, 64], sizes = [8, 32], strides = [1, 1]} : vector<8x128xf32> to vector<8x32xf32>
    %265 = math.tanh %264 : vector<8x32xf32>
    %266 = arith.mulf %262, %229 : vector<8x32xf32>
    %267 = arith.mulf %261, %265 : vector<8x32xf32>
    %268 = arith.addf %266, %267 : vector<8x32xf32>
    %269 = math.tanh %268 : vector<8x32xf32>
    %270 = arith.mulf %263, %269 : vector<8x32xf32>
    %271 = vector.extract_strided_slice %44 {offsets = [48, 0], sizes = [8, 32], strides = [1, 1]} : vector<64x32xf32> to vector<8x32xf32>
    %272 = tpu.concatenate %271, %253 in 1 : vector<8x32xf32>, vector<8x32xf32> -> vector<8x64xf32>
    %273 = tpu.concatenate %253, %270 in 1 : vector<8x32xf32>, vector<8x32xf32> -> vector<8x64xf32>
    %274 = tpu.concatenate %272, %273 in 0 : vector<8x64xf32>, vector<8x64xf32> -> vector<16x64xf32>
    %cst_29 = arith.constant dense<0.000000e+00> : vector<16x256xf32>
    %275 = tpu.matmul %274, %45, %cst_29 {dimension_numbers = #tpu.dot_dimension_numbers<[1], [0], [0], [1], [0, 0, 1, 1], [], []>} : vector<16x64xf32>, vector<64x256xf32>, vector<16x256xf32> -> vector<16x256xf32>
    %276 = vector.extract_strided_slice %275 {offsets = [0, 0], sizes = [8, 128], strides = [1, 1]} : vector<16x256xf32> to vector<8x128xf32>
    %277 = arith.addf %276, %48 : vector<8x128xf32>
    %278 = arith.negf %277 : vector<8x128xf32>
    %279 = math.exp %278 : vector<8x128xf32>
    %cst_30 = arith.constant 1.000000e+00 : f32
    %280 = vector.broadcast %cst_30 : f32 to vector<8x128xf32>
    %281 = arith.addf %280, %279 : vector<8x128xf32>
    %282 = arith.divf %280, %281 : vector<8x128xf32>
    %283 = vector.extract_strided_slice %282 {offsets = [0, 0], sizes = [8, 32], strides = [1, 1]} : vector<8x128xf32> to vector<8x32xf32>
    %284 = vector.extract_strided_slice %282 {offsets = [0, 32], sizes = [8, 32], strides = [1, 1]} : vector<8x128xf32> to vector<8x32xf32>
    %285 = vector.extract_strided_slice %282 {offsets = [0, 96], sizes = [8, 32], strides = [1, 1]} : vector<8x128xf32> to vector<8x32xf32>
    %286 = vector.extract_strided_slice %277 {offsets = [0, 64], sizes = [8, 32], strides = [1, 1]} : vector<8x128xf32> to vector<8x32xf32>
    %287 = math.tanh %286 : vector<8x32xf32>
    %288 = arith.mulf %284, %251 : vector<8x32xf32>
    %289 = arith.mulf %283, %287 : vector<8x32xf32>
    %290 = arith.addf %288, %289 : vector<8x32xf32>
    %291 = math.tanh %290 : vector<8x32xf32>
    %292 = arith.mulf %285, %291 : vector<8x32xf32>
    %293 = vector.extract_strided_slice %275 {offsets = [8, 128], sizes = [8, 128], strides = [1, 1]} : vector<16x256xf32> to vector<8x128xf32>
    %294 = arith.addf %293, %51 : vector<8x128xf32>
    %295 = arith.negf %294 : vector<8x128xf32>
    %296 = math.exp %295 : vector<8x128xf32>
    %cst_31 = arith.constant 1.000000e+00 : f32
    %297 = vector.broadcast %cst_31 : f32 to vector<8x128xf32>
    %298 = arith.addf %297, %296 : vector<8x128xf32>
    %299 = arith.divf %297, %298 : vector<8x128xf32>
    %300 = vector.extract_strided_slice %299 {offsets = [0, 0], sizes = [8, 32], strides = [1, 1]} : vector<8x128xf32> to vector<8x32xf32>
    %301 = vector.extract_strided_slice %299 {offsets = [0, 32], sizes = [8, 32], strides = [1, 1]} : vector<8x128xf32> to vector<8x32xf32>
    %302 = vector.extract_strided_slice %299 {offsets = [0, 96], sizes = [8, 32], strides = [1, 1]} : vector<8x128xf32> to vector<8x32xf32>
    %303 = vector.extract_strided_slice %294 {offsets = [0, 64], sizes = [8, 32], strides = [1, 1]} : vector<8x128xf32> to vector<8x32xf32>
    %304 = math.tanh %303 : vector<8x32xf32>
    %305 = arith.mulf %301, %268 : vector<8x32xf32>
    %306 = arith.mulf %300, %304 : vector<8x32xf32>
    %307 = arith.addf %305, %306 : vector<8x32xf32>
    %308 = math.tanh %307 : vector<8x32xf32>
    %309 = arith.mulf %302, %308 : vector<8x32xf32>
    %310 = vector.extract_strided_slice %44 {offsets = [56, 0], sizes = [8, 32], strides = [1, 1]} : vector<64x32xf32> to vector<8x32xf32>
    %311 = tpu.concatenate %310, %292 in 1 : vector<8x32xf32>, vector<8x32xf32> -> vector<8x64xf32>
    %312 = tpu.concatenate %292, %309 in 1 : vector<8x32xf32>, vector<8x32xf32> -> vector<8x64xf32>
    %313 = tpu.concatenate %311, %312 in 0 : vector<8x64xf32>, vector<8x64xf32> -> vector<16x64xf32>
    %cst_32 = arith.constant dense<0.000000e+00> : vector<16x256xf32>
    %314 = tpu.matmul %313, %45, %cst_32 {dimension_numbers = #tpu.dot_dimension_numbers<[1], [0], [0], [1], [0, 0, 1, 1], [], []>} : vector<16x64xf32>, vector<64x256xf32>, vector<16x256xf32> -> vector<16x256xf32>
    %315 = vector.extract_strided_slice %314 {offsets = [0, 0], sizes = [8, 128], strides = [1, 1]} : vector<16x256xf32> to vector<8x128xf32>
    %316 = arith.addf %315, %48 : vector<8x128xf32>
    %317 = arith.negf %316 : vector<8x128xf32>
    %318 = math.exp %317 : vector<8x128xf32>
    %cst_33 = arith.constant 1.000000e+00 : f32
    %319 = vector.broadcast %cst_33 : f32 to vector<8x128xf32>
    %320 = arith.addf %319, %318 : vector<8x128xf32>
    %321 = arith.divf %319, %320 : vector<8x128xf32>
    %322 = vector.extract_strided_slice %321 {offsets = [0, 0], sizes = [8, 32], strides = [1, 1]} : vector<8x128xf32> to vector<8x32xf32>
    %323 = vector.extract_strided_slice %321 {offsets = [0, 32], sizes = [8, 32], strides = [1, 1]} : vector<8x128xf32> to vector<8x32xf32>
    %324 = vector.extract_strided_slice %321 {offsets = [0, 96], sizes = [8, 32], strides = [1, 1]} : vector<8x128xf32> to vector<8x32xf32>
    %325 = vector.extract_strided_slice %316 {offsets = [0, 64], sizes = [8, 32], strides = [1, 1]} : vector<8x128xf32> to vector<8x32xf32>
    %326 = math.tanh %325 : vector<8x32xf32>
    %327 = arith.mulf %323, %290 : vector<8x32xf32>
    %328 = arith.mulf %322, %326 : vector<8x32xf32>
    %329 = arith.addf %327, %328 : vector<8x32xf32>
    %330 = math.tanh %329 : vector<8x32xf32>
    %331 = arith.mulf %324, %330 : vector<8x32xf32>
    %332 = vector.extract_strided_slice %314 {offsets = [8, 128], sizes = [8, 128], strides = [1, 1]} : vector<16x256xf32> to vector<8x128xf32>
    %333 = arith.addf %332, %51 : vector<8x128xf32>
    %334 = arith.negf %333 : vector<8x128xf32>
    %335 = math.exp %334 : vector<8x128xf32>
    %cst_34 = arith.constant 1.000000e+00 : f32
    %336 = vector.broadcast %cst_34 : f32 to vector<8x128xf32>
    %337 = arith.addf %336, %335 : vector<8x128xf32>
    %338 = arith.divf %336, %337 : vector<8x128xf32>
    %339 = vector.extract_strided_slice %338 {offsets = [0, 0], sizes = [8, 32], strides = [1, 1]} : vector<8x128xf32> to vector<8x32xf32>
    %340 = vector.extract_strided_slice %338 {offsets = [0, 32], sizes = [8, 32], strides = [1, 1]} : vector<8x128xf32> to vector<8x32xf32>
    %341 = vector.extract_strided_slice %338 {offsets = [0, 96], sizes = [8, 32], strides = [1, 1]} : vector<8x128xf32> to vector<8x32xf32>
    %342 = vector.extract_strided_slice %333 {offsets = [0, 64], sizes = [8, 32], strides = [1, 1]} : vector<8x128xf32> to vector<8x32xf32>
    %343 = math.tanh %342 : vector<8x32xf32>
    %344 = arith.mulf %340, %307 : vector<8x32xf32>
    %345 = arith.mulf %339, %343 : vector<8x32xf32>
    %346 = arith.addf %344, %345 : vector<8x32xf32>
    %347 = math.tanh %346 : vector<8x32xf32>
    %348 = arith.mulf %341, %347 : vector<8x32xf32>
    %349 = tpu.concatenate %331, %348 in 1 : vector<8x32xf32>, vector<8x32xf32> -> vector<8x64xf32>
    %cst_35 = arith.constant dense<0.000000e+00> : vector<8x256xf32>
    %350 = tpu.matmul %349, %45, %cst_35 {dimension_numbers = #tpu.dot_dimension_numbers<[1], [0], [0], [1], [0, 0, 1, 1], [], []>} : vector<8x64xf32>, vector<64x256xf32>, vector<8x256xf32> -> vector<8x256xf32>
    %351 = vector.extract_strided_slice %350 {offsets = [0, 128], sizes = [8, 128], strides = [1, 1]} : vector<8x256xf32> to vector<8x128xf32>
    %352 = arith.addf %351, %51 : vector<8x128xf32>
    %353 = arith.negf %352 : vector<8x128xf32>
    %354 = math.exp %353 : vector<8x128xf32>
    %cst_36 = arith.constant 1.000000e+00 : f32
    %355 = vector.broadcast %cst_36 : f32 to vector<8x128xf32>
    %356 = arith.addf %355, %354 : vector<8x128xf32>
    %357 = arith.divf %355, %356 : vector<8x128xf32>
    %358 = vector.extract_strided_slice %357 {offsets = [0, 0], sizes = [8, 32], strides = [1, 1]} : vector<8x128xf32> to vector<8x32xf32>
    %359 = vector.extract_strided_slice %357 {offsets = [0, 32], sizes = [8, 32], strides = [1, 1]} : vector<8x128xf32> to vector<8x32xf32>
    %360 = vector.extract_strided_slice %357 {offsets = [0, 96], sizes = [8, 32], strides = [1, 1]} : vector<8x128xf32> to vector<8x32xf32>
    %361 = vector.extract_strided_slice %352 {offsets = [0, 64], sizes = [8, 32], strides = [1, 1]} : vector<8x128xf32> to vector<8x32xf32>
    %362 = math.tanh %361 : vector<8x32xf32>
    %363 = arith.mulf %359, %346 : vector<8x32xf32>
    %364 = arith.mulf %358, %362 : vector<8x32xf32>
    %365 = arith.addf %363, %364 : vector<8x32xf32>
    %366 = math.tanh %365 : vector<8x32xf32>
    %367 = arith.mulf %360, %366 : vector<8x32xf32>
    %cst_37 = arith.constant 0.000000e+00 : f32
    %368 = vector.broadcast %cst_37 : f32 to vector<8x32xf32>
    %369 = arith.mulf %114, %114 : vector<8x32xf32>
    %cst_38 = arith.constant dense<0.000000e+00> : vector<8xf32>
    %370 = vector.multi_reduction <add>, %369, %cst_38 [1] : vector<8x32xf32> to vector<8xf32>
    %371 = vector.shape_cast %370 : vector<8xf32> to vector<8x1xf32>
    %cst_39 = arith.constant 1.000000e-24 : f32
    %372 = vector.broadcast %cst_39 : f32 to vector<8x1xf32>
    %373 = arith.maximumf %371, %372 : vector<8x1xf32>
    %374 = math.rsqrt %373 : vector<8x1xf32>
    %375 = vector.broadcast %374 : vector<8x1xf32> to vector<8x32xf32>
    %376 = arith.mulf %114, %375 : vector<8x32xf32>
    %377 = arith.addf %368, %376 : vector<8x32xf32>
    %378 = arith.mulf %153, %153 : vector<8x32xf32>
    %cst_40 = arith.constant dense<0.000000e+00> : vector<8xf32>
    %379 = vector.multi_reduction <add>, %378, %cst_40 [1] : vector<8x32xf32> to vector<8xf32>
    %380 = vector.shape_cast %379 : vector<8xf32> to vector<8x1xf32>
    %cst_41 = arith.constant 1.000000e-24 : f32
    %381 = vector.broadcast %cst_41 : f32 to vector<8x1xf32>
    %382 = arith.maximumf %380, %381 : vector<8x1xf32>
    %383 = math.rsqrt %382 : vector<8x1xf32>
    %384 = vector.broadcast %383 : vector<8x1xf32> to vector<8x32xf32>
    %385 = arith.mulf %153, %384 : vector<8x32xf32>
    %386 = arith.addf %377, %385 : vector<8x32xf32>
    %387 = arith.mulf %192, %192 : vector<8x32xf32>
    %cst_42 = arith.constant dense<0.000000e+00> : vector<8xf32>
    %388 = vector.multi_reduction <add>, %387, %cst_42 [1] : vector<8x32xf32> to vector<8xf32>
    %389 = vector.shape_cast %388 : vector<8xf32> to vector<8x1xf32>
    %cst_43 = arith.constant 1.000000e-24 : f32
    %390 = vector.broadcast %cst_43 : f32 to vector<8x1xf32>
    %391 = arith.maximumf %389, %390 : vector<8x1xf32>
    %392 = math.rsqrt %391 : vector<8x1xf32>
    %393 = vector.broadcast %392 : vector<8x1xf32> to vector<8x32xf32>
    %394 = arith.mulf %192, %393 : vector<8x32xf32>
    %395 = arith.addf %386, %394 : vector<8x32xf32>
    %396 = arith.mulf %231, %231 : vector<8x32xf32>
    %cst_44 = arith.constant dense<0.000000e+00> : vector<8xf32>
    %397 = vector.multi_reduction <add>, %396, %cst_44 [1] : vector<8x32xf32> to vector<8xf32>
    %398 = vector.shape_cast %397 : vector<8xf32> to vector<8x1xf32>
    %cst_45 = arith.constant 1.000000e-24 : f32
    %399 = vector.broadcast %cst_45 : f32 to vector<8x1xf32>
    %400 = arith.maximumf %398, %399 : vector<8x1xf32>
    %401 = math.rsqrt %400 : vector<8x1xf32>
    %402 = vector.broadcast %401 : vector<8x1xf32> to vector<8x32xf32>
    %403 = arith.mulf %231, %402 : vector<8x32xf32>
    %404 = arith.addf %395, %403 : vector<8x32xf32>
    %405 = arith.mulf %270, %270 : vector<8x32xf32>
    %cst_46 = arith.constant dense<0.000000e+00> : vector<8xf32>
    %406 = vector.multi_reduction <add>, %405, %cst_46 [1] : vector<8x32xf32> to vector<8xf32>
    %407 = vector.shape_cast %406 : vector<8xf32> to vector<8x1xf32>
    %cst_47 = arith.constant 1.000000e-24 : f32
    %408 = vector.broadcast %cst_47 : f32 to vector<8x1xf32>
    %409 = arith.maximumf %407, %408 : vector<8x1xf32>
    %410 = math.rsqrt %409 : vector<8x1xf32>
    %411 = vector.broadcast %410 : vector<8x1xf32> to vector<8x32xf32>
    %412 = arith.mulf %270, %411 : vector<8x32xf32>
    %413 = arith.addf %404, %412 : vector<8x32xf32>
    %414 = arith.mulf %309, %309 : vector<8x32xf32>
    %cst_48 = arith.constant dense<0.000000e+00> : vector<8xf32>
    %415 = vector.multi_reduction <add>, %414, %cst_48 [1] : vector<8x32xf32> to vector<8xf32>
    %416 = vector.shape_cast %415 : vector<8xf32> to vector<8x1xf32>
    %cst_49 = arith.constant 1.000000e-24 : f32
    %417 = vector.broadcast %cst_49 : f32 to vector<8x1xf32>
    %418 = arith.maximumf %416, %417 : vector<8x1xf32>
    %419 = math.rsqrt %418 : vector<8x1xf32>
    %420 = vector.broadcast %419 : vector<8x1xf32> to vector<8x32xf32>
    %421 = arith.mulf %309, %420 : vector<8x32xf32>
    %422 = arith.addf %413, %421 : vector<8x32xf32>
    %423 = arith.mulf %348, %348 : vector<8x32xf32>
    %cst_50 = arith.constant dense<0.000000e+00> : vector<8xf32>
    %424 = vector.multi_reduction <add>, %423, %cst_50 [1] : vector<8x32xf32> to vector<8xf32>
    %425 = vector.shape_cast %424 : vector<8xf32> to vector<8x1xf32>
    %cst_51 = arith.constant 1.000000e-24 : f32
    %426 = vector.broadcast %cst_51 : f32 to vector<8x1xf32>
    %427 = arith.maximumf %425, %426 : vector<8x1xf32>
    %428 = math.rsqrt %427 : vector<8x1xf32>
    %429 = vector.broadcast %428 : vector<8x1xf32> to vector<8x32xf32>
    %430 = arith.mulf %348, %429 : vector<8x32xf32>
    %431 = arith.addf %422, %430 : vector<8x32xf32>
    %432 = arith.mulf %367, %367 : vector<8x32xf32>
    %cst_52 = arith.constant dense<0.000000e+00> : vector<8xf32>
    %433 = vector.multi_reduction <add>, %432, %cst_52 [1] : vector<8x32xf32> to vector<8xf32>
    %434 = vector.shape_cast %433 : vector<8xf32> to vector<8x1xf32>
    %cst_53 = arith.constant 1.000000e-24 : f32
    %435 = vector.broadcast %cst_53 : f32 to vector<8x1xf32>
    %436 = arith.maximumf %434, %435 : vector<8x1xf32>
    %437 = math.rsqrt %436 : vector<8x1xf32>
    %438 = vector.broadcast %437 : vector<8x1xf32> to vector<8x32xf32>
    %439 = arith.mulf %367, %438 : vector<8x32xf32>
    %440 = arith.addf %431, %439 : vector<8x32xf32>
    %441 = tpu.concatenate %376, %385, %394, %403, %412, %421, %430, %439 in 1 : vector<8x32xf32>, vector<8x32xf32>, vector<8x32xf32>, vector<8x32xf32>, vector<8x32xf32>, vector<8x32xf32>, vector<8x32xf32>, vector<8x32xf32> -> vector<8x256xf32>
    %c0_54 = arith.constant 0 : index
    %c0_55 = arith.constant 0 : index
    %442 = vector.load %arg11[%c0_54, %c0_55] : memref<8x256xf32, #tpu.memory_space<vmem>>, vector<8x256xf32>
    tpu.vector_store %arg11[%c0_54, %c0_55], %441 {strides = array<i32>} : memref<8x256xf32, #tpu.memory_space<vmem>>, vector<8x256xf32>,
    %cst_56 = arith.constant 1.250000e-01 : f32
    %443 = vector.broadcast %cst_56 : f32 to vector<8x32xf32>
    %444 = arith.mulf %440, %443 : vector<8x32xf32>
    %445 = arith.mulf %444, %444 : vector<8x32xf32>
    %cst_57 = arith.constant dense<0.000000e+00> : vector<8xf32>
    %446 = vector.multi_reduction <add>, %445, %cst_57 [1] : vector<8x32xf32> to vector<8xf32>
    %447 = vector.shape_cast %446 : vector<8xf32> to vector<8x1xf32>
    %cst_58 = arith.constant 1.000000e-24 : f32
    %448 = vector.broadcast %cst_58 : f32 to vector<8x1xf32>
    %449 = arith.maximumf %447, %448 : vector<8x1xf32>
    %450 = math.rsqrt %449 : vector<8x1xf32>
    %451 = vector.broadcast %450 : vector<8x1xf32> to vector<8x32xf32>
    %452 = arith.mulf %444, %451 : vector<8x32xf32>
    %c0_59 = arith.constant 0 : index
    %c0_60 = arith.constant 0 : index
    %453 = vector.load %arg5[%c0_59, %c0_60] : memref<32x64xf32, #tpu.memory_space<vmem>>, vector<32x64xf32>
    %cst_61 = arith.constant dense<0.000000e+00> : vector<8x64xf32>
    %454 = tpu.matmul %452, %453, %cst_61 {dimension_numbers = #tpu.dot_dimension_numbers<[1], [0], [0], [1], [0, 0, 1, 1], [], []>} : vector<8x32xf32>, vector<32x64xf32>, vector<8x64xf32> -> vector<8x64xf32>
    %c0_62 = arith.constant 0 : index
    %c0_63 = arith.constant 0 : index
    %455 = vector.load %arg6[%c0_62, %c0_63] : memref<1x64xf32, #tpu.memory_space<vmem>>, vector<1x64xf32>
    %456 = vector.broadcast %455 : vector<1x64xf32> to vector<8x64xf32>
    %457 = arith.addf %454, %456 : vector<8x64xf32>
    %cst_64 = arith.constant 0.000000e+00 : f32
    %458 = vector.broadcast %cst_64 : f32 to vector<8x64xf32>
    %459 = arith.maximumf %457, %458 : vector<8x64xf32>
    %c0_65 = arith.constant 0 : index
    %c0_66 = arith.constant 0 : index
    %460 = vector.load %arg7[%c0_65, %c0_66] : memref<64x64xf32, #tpu.memory_space<vmem>>, vector<64x64xf32>
    %cst_67 = arith.constant dense<0.000000e+00> : vector<8x64xf32>
    %461 = tpu.matmul %459, %460, %cst_67 {dimension_numbers = #tpu.dot_dimension_numbers<[1], [0], [0], [1], [0, 0, 1, 1], [], []>} : vector<8x64xf32>, vector<64x64xf32>, vector<8x64xf32> -> vector<8x64xf32>
    %c0_68 = arith.constant 0 : index
    %c0_69 = arith.constant 0 : index
    %462 = vector.load %arg8[%c0_68, %c0_69] : memref<1x64xf32, #tpu.memory_space<vmem>>, vector<1x64xf32>
    %463 = vector.broadcast %462 : vector<1x64xf32> to vector<8x64xf32>
    %464 = arith.addf %461, %463 : vector<8x64xf32>
    %cst_70 = arith.constant 0.000000e+00 : f32
    %465 = vector.broadcast %cst_70 : f32 to vector<8x64xf32>
    %466 = arith.maximumf %464, %465 : vector<8x64xf32>
    %c0_71 = arith.constant 0 : index
    %c0_72 = arith.constant 0 : index
    %467 = vector.load %arg9[%c0_71, %c0_72] : memref<64x1xf32, #tpu.memory_space<vmem>>, vector<64x1xf32>
    %cst_73 = arith.constant dense<0.000000e+00> : vector<8x1xf32>
    %468 = tpu.matmul %466, %467, %cst_73 {dimension_numbers = #tpu.dot_dimension_numbers<[1], [0], [0], [1], [0, 0, 1, 1], [], []>} : vector<8x64xf32>, vector<64x1xf32>, vector<8x1xf32> -> vector<8x1xf32>
    %c0_74 = arith.constant 0 : index
    %c0_75 = arith.constant 0 : index
    %469 = vector.load %arg10[%c0_74, %c0_75] : memref<1x1xf32, #tpu.memory_space<vmem>>, vector<1x1xf32>
    %470 = vector.broadcast %469 : vector<1x1xf32> to vector<8x1xf32>
    %471 = arith.addf %468, %470 : vector<8x1xf32>
    %472 = arith.negf %471 : vector<8x1xf32>
    %473 = math.exp %472 : vector<8x1xf32>
    %cst_76 = arith.constant 1.000000e+00 : f32
    %474 = vector.broadcast %cst_76 : f32 to vector<8x1xf32>
    %475 = arith.addf %474, %473 : vector<8x1xf32>
    %476 = arith.divf %474, %475 : vector<8x1xf32>
    %cst_77 = arith.constant 0.000000e+00 : f32
    %477 = vector.broadcast %cst_77 : f32 to vector<8x95xf32>
    %478 = tpu.concatenate %331, %367, %329, %365, %452, %476, %477 in 1 : vector<8x32xf32>, vector<8x32xf32>, vector<8x32xf32>, vector<8x32xf32>, vector<8x32xf32>, vector<8x1xf32>, vector<8x95xf32> -> vector<8x256xf32>
    %c0_78 = arith.constant 0 : index
    %c0_79 = arith.constant 0 : index
    %479 = vector.load %arg12[%c0_78, %c0_79] : memref<8x256xf32, #tpu.memory_space<vmem>>, vector<8x256xf32>
    tpu.vector_store %arg12[%c0_78, %c0_79], %478 {strides = array<i32>} : memref<8x256xf32, #tpu.memory_space<vmem>>, vector<8x256xf32>,
    return
  }
  func.func @transform_0(%arg0: i32) -> (i32, i32) {
    %c0_i32 = arith.constant 0 : i32
    %c0_i32_0 = arith.constant 0 : i32
    return %arg0, %c0_i32 : i32, i32
  }
  func.func @transform_1(%arg0: i32) -> (i32, i32) {
    %c0_i32 = arith.constant 0 : i32
    %c0_i32_0 = arith.constant 0 : i32
    %c0_i32_1 = arith.constant 0 : i32
    return %c0_i32, %c0_i32_0 : i32, i32
  }
  func.func @transform_2(%arg0: i32) -> (i32, i32) {
    %c0_i32 = arith.constant 0 : i32
    %c0_i32_0 = arith.constant 0 : i32
    %c0_i32_1 = arith.constant 0 : i32
    return %c0_i32, %c0_i32_0 : i32, i32
  }
  func.func @transform_3(%arg0: i32) -> (i32, i32) {
    %c0_i32 = arith.constant 0 : i32
    %c0_i32_0 = arith.constant 0 : i32
    %c0_i32_1 = arith.constant 0 : i32
    return %c0_i32, %c0_i32_0 : i32, i32
  }
  func.func @transform_4(%arg0: i32) -> (i32, i32) {
    %c0_i32 = arith.constant 0 : i32
    %c0_i32_0 = arith.constant 0 : i32
    %c0_i32_1 = arith.constant 0 : i32
    return %c0_i32, %c0_i32_0 : i32, i32
  }
  func.func @transform_5(%arg0: i32) -> (i32, i32) {
    %c0_i32 = arith.constant 0 : i32
    %c0_i32_0 = arith.constant 0 : i32
    %c0_i32_1 = arith.constant 0 : i32
    return %c0_i32, %c0_i32_0 : i32, i32
  }
  func.func @transform_6(%arg0: i32) -> (i32, i32) {
    %c0_i32 = arith.constant 0 : i32
    %c0_i32_0 = arith.constant 0 : i32
    %c0_i32_1 = arith.constant 0 : i32
    return %c0_i32, %c0_i32_0 : i32, i32
  }
  func.func @transform_7(%arg0: i32) -> (i32, i32) {
    %c0_i32 = arith.constant 0 : i32
    %c0_i32_0 = arith.constant 0 : i32
    %c0_i32_1 = arith.constant 0 : i32
    return %c0_i32, %c0_i32_0 : i32, i32
  }
  func.func @transform_8(%arg0: i32) -> (i32, i32) {
    %c0_i32 = arith.constant 0 : i32
    %c0_i32_0 = arith.constant 0 : i32
    %c0_i32_1 = arith.constant 0 : i32
    return %c0_i32, %c0_i32_0 : i32, i32
  }
  func.func @transform_9(%arg0: i32) -> (i32, i32) {
    %c0_i32 = arith.constant 0 : i32
    %c0_i32_0 = arith.constant 0 : i32
    %c0_i32_1 = arith.constant 0 : i32
    return %c0_i32, %c0_i32_0 : i32, i32
  }
  func.func @transform_10(%arg0: i32) -> (i32, i32) {
    %c0_i32 = arith.constant 0 : i32
    %c0_i32_0 = arith.constant 0 : i32
    return %arg0, %c0_i32 : i32, i32
  }
  func.func @transform_11(%arg0: i32) -> (i32, i32) {
    %c0_i32 = arith.constant 0 : i32
    %c0_i32_0 = arith.constant 0 : i32
    return %arg0, %c0_i32 : i32, i32
  }
}

</mosaic_0001>

<llo_original>
// kernel: tpu_custom_call.1
$region0: #{tpu_custom_call.1}
  #allocation0 [shape = 'u32[]', space=smem, size = 0x4, offset = 0x4, fixed_abs, tag = 'smem constant byte address 0x4 - core index']
  #allocation1 [shape = 'u32[144,128]{1,0:T(1,128)}', space=vmem, size = 0x12000, scoped, tag = 'internal scratch']
  #allocation2 [shape = 'f32[1,1]{1,0:T(1,128)S(1)}', space=vmem, size = 0x200, scoped, tag = 'scoped memory for tpu_custom_call.1']
  %s0 = inlined_call_operand.vmem [shape: s32[8,8], index: 0, kind: input, shape index: {}]
  %s1 = inlined_call_operand.hbm [shape: f32[12,32], index: 1, kind: input, shape index: {}]
  %s2 = inlined_call_operand.hbm [shape: f32[64,256], index: 2, kind: input, shape index: {}]
  %s3 = inlined_call_operand.vmem [shape: f32[2,128], index: 3, kind: input, shape index: {}]
  %s4 = inlined_call_operand.hbm [shape: f32[32,64], index: 4, kind: input, shape index: {}]
  %s5 = inlined_call_operand.vmem [shape: f32[1,64], index: 5, kind: input, shape index: {}]
  %s6 = inlined_call_operand.vmem [shape: f32[64,64], index: 6, kind: input, shape index: {}]
  %s7 = inlined_call_operand.vmem [shape: f32[1,64], index: 7, kind: input, shape index: {}]
  %s8 = inlined_call_operand.vmem [shape: f32[64,1], index: 8, kind: input, shape index: {}]
  %s9 = inlined_call_operand.<no memory space> [shape: f32[1,1], index: 9, kind: input, shape index: {}]
  %s10 = inlined_call_operand.hbm [shape: f32[8,256], index: 10, kind: output, shape index: {0}]
  %s11 = inlined_call_operand.hbm [shape: f32[8,256], index: 11, kind: output, shape index: {1}]
  %12 = xla_tuple %s10, %s11
  %s13 = sld [smem:[#allocation0]]
  $region70: #{tpu_custom_call.1} parent=0
    _
  %s15 = ssub.s32 1, %s13
  %s16 = scalar_select 0, %s15, %s13
  %v17 = vstv %s9
  %18 = vst [vmem:[#allocation2] sm:$0x1] %v17
  $region1: #{tpu_custom_call.1} parent=0
    #allocation3 [shape = 'u8[8192]{0}', space=vmem, size = 0x2000, scoped, tag = 'input window, operand 1, single buffered']
    #allocation4 [shape = 's32[1]{0}', space=sflag, size = 0x4, scoped, tag = 'scoped memory for tpu_custom_call.1']
    #allocation5 [shape = 's32[1]{0}', space=sflag, size = 0x4, scoped, tag = 'scoped memory for tpu_custom_call.1']
    #allocation6 [shape = 'u8[65536]{0}', space=vmem, size = 0x10000, scoped, tag = 'input window, operand 2, single buffered']
    #allocation7 [shape = 's32[1]{0}', space=sflag, size = 0x4, scoped, tag = 'scoped memory for tpu_custom_call.1']
    #allocation8 [shape = 'u8[16384]{0}', space=vmem, size = 0x4000, scoped, tag = 'input window, operand 4, single buffered']
    #allocation9 [shape = 'u8[8192]{0}', space=vmem, size = 0x2000, scoped, tag = 'output window, operand 0, single buffered']
    #allocation10 [shape = 'u8[8192]{0}', space=vmem, size = 0x2000, scoped, tag = 'output window, operand 1, single buffered']
    #allocation11 [shape = 's32[1]{0}', space=sflag, size = 0x4, scoped, tag = 'scoped memory for tpu_custom_call.1']
    %19 = vsyncpa [#allocation4], 0
    %20 = vsyncpa [#allocation7], 0
    %21 = vsyncpa [#allocation5], 0
    %22 = vsyncpa [#allocation11], 0
    // Predicated region
    $region2: #{tpu_custom_call.1} parent=1 // pred_check
      _
    $region3: #{tpu_custom_call.1} parent=1 // pred_check_branch
      %24 = sbr.rel (0) target = $region5
    $region4: #{tpu_custom_call.1} parent=1 // pred_region
      _
    $region5: #{tpu_custom_call.1} parent=1 // pred_fallthru
      _
    // Predicated region
    $region6: #{tpu_custom_call.1} parent=1 // pred_check
      _
    $region7: #{tpu_custom_call.1} parent=1 // pred_check_branch
      %26 = sbr.rel (0) target = $region9
    $region8: #{tpu_custom_call.1} parent=1 // pred_region
      %s28 = ssub.s32 256, 256
      %29 = vsyncadd [#allocation4], %s28
      %s30 = sshll.u32 [#allocation3], 4
      %s31 = int_to_ptr.vmem [resolvable:$true] %s30
      %36 = dma.hbm_to_vmem [thread:$0]  %s1, 256, %s31, [#allocation4], 128, 128, 8
    $region9: #{tpu_custom_call.1} parent=1 // pred_fallthru
      _
    // Predicated region
    $region10: #{tpu_custom_call.1} parent=1 // pred_check
      _
    $region11: #{tpu_custom_call.1} parent=1 // pred_check_branch
      %38 = sbr.rel (0) target = $region13
    $region12: #{tpu_custom_call.1} parent=1 // pred_region
      %s40 = ssub.s32 2048, 2048
      %41 = vsyncadd [#allocation7], %s40
      %s42 = sshll.u32 [#allocation6], 4
      %s43 = int_to_ptr.vmem [resolvable:$true] %s42
      %48 = dma.hbm_to_vmem [thread:$0]  %s2, 2048, %s43, [#allocation7], 256, 256, 16
    $region13: #{tpu_custom_call.1} parent=1 // pred_fallthru
      _
    // Predicated region
    $region14: #{tpu_custom_call.1} parent=1 // pred_check
      _
    $region15: #{tpu_custom_call.1} parent=1 // pred_check_branch
      %50 = sbr.rel (0) target = $region17
    $region16: #{tpu_custom_call.1} parent=1 // pred_region
      _
    $region17: #{tpu_custom_call.1} parent=1 // pred_fallthru
      _
    // Predicated region
    $region18: #{tpu_custom_call.1} parent=1 // pred_check
      _
    $region19: #{tpu_custom_call.1} parent=1 // pred_check_branch
      %52 = sbr.rel (0) target = $region21
    $region20: #{tpu_custom_call.1} parent=1 // pred_region
      %s54 = ssub.s32 512, 512
      %55 = vsyncadd [#allocation7], %s54
      %s56 = sshll.u32 [#allocation8], 4
      %s57 = int_to_ptr.vmem [resolvable:$true] %s56
      %62 = dma.hbm_to_vmem [thread:$0]  %s4, 512, %s57, [#allocation7], 128, 128, 8
    $region21: #{tpu_custom_call.1} parent=1 // pred_fallthru
      _
    // Predicated region
    $region22: #{tpu_custom_call.1} parent=1 // pred_check
      _
    $region23: #{tpu_custom_call.1} parent=1 // pred_check_branch
      %64 = sbr.rel (0) target = $region25
    $region24: #{tpu_custom_call.1} parent=1 // pred_region
      _
    $region25: #{tpu_custom_call.1} parent=1 // pred_fallthru
      _
    // Predicated region
    $region26: #{tpu_custom_call.1} parent=1 // pred_check
      _
    $region27: #{tpu_custom_call.1} parent=1 // pred_check_branch
      %66 = sbr.rel (0) target = $region29
    $region28: #{tpu_custom_call.1} parent=1 // pred_region
      _
    $region29: #{tpu_custom_call.1} parent=1 // pred_fallthru
      _
    // Predicated region
    $region30: #{tpu_custom_call.1} parent=1 // pred_check
      _
    $region31: #{tpu_custom_call.1} parent=1 // pred_check_branch
      %68 = sbr.rel (0) target = $region33
    $region32: #{tpu_custom_call.1} parent=1 // pred_region
      _
    $region33: #{tpu_custom_call.1} parent=1 // pred_fallthru
      _
    // Predicated region
    $region34: #{tpu_custom_call.1} parent=1 // pred_check
      _
    $region35: #{tpu_custom_call.1} parent=1 // pred_check_branch
      %70 = sbr.rel (0) target = $region37
    $region36: #{tpu_custom_call.1} parent=1 // pred_region
      _
    $region37: #{tpu_custom_call.1} parent=1 // pred_fallthru
      _
    // Predicated region
    $region38: #{tpu_custom_call.1} parent=1 // pred_check
      _
    $region39: #{tpu_custom_call.1} parent=1 // pred_check_branch
      %72 = sbr.rel (0) target = $region41
    $region40: #{tpu_custom_call.1} parent=1 // pred_region
      _
    $region41: #{tpu_custom_call.1} parent=1 // pred_fallthru
      _
    // Predicated region
    $region42: #{tpu_custom_call.1} parent=1 // pred_check
      _
    $region43: #{tpu_custom_call.1} parent=1 // pred_check_branch
      %74 = sbr.rel (0) target = $region45
    $region44: #{tpu_custom_call.1} parent=1 // pred_region
      %75 = dma.done [#allocation4], 256
    $region45: #{tpu_custom_call.1} parent=1 // pred_fallthru
      _
    // Predicated region
    $region46: #{tpu_custom_call.1} parent=1 // pred_check
      _
    $region47: #{tpu_custom_call.1} parent=1 // pred_check_branch
      %77 = sbr.rel (0) target = $region49
    $region48: #{tpu_custom_call.1} parent=1 // pred_region
      %78 = dma.done [#allocation7], 2048
    $region49: #{tpu_custom_call.1} parent=1 // pred_fallthru
      _
    // Predicated region
    $region50: #{tpu_custom_call.1} parent=1 // pred_check
      _
    $region51: #{tpu_custom_call.1} parent=1 // pred_check_branch
      %80 = sbr.rel (0) target = $region53
    $region52: #{tpu_custom_call.1} parent=1 // pred_region
      %81 = dma.done [#allocation7], 512
    $region53: #{tpu_custom_call.1} parent=1 // pred_fallthru
      _
    %v82 = vld [vmem:[%s0] sm:$0xff]
    %v83 = vlaneseq
    %v84 = vand.u32 %v83, 127
    %85 = vset.pattern.permute.xlu0 0
    %86 = vperm.xlu0 %85, %v82
    %v87 = vpop.permute.xlu0 %86
    %vm88 = vcmp.eq.s32.totalorder %v87, %v84
    %v89 = vsel %vm88, 1, 0
    %v90 = vcvt.s32.f32 %v89
    %91 = vset.pattern.permute.xlu0 1
    %92 = vperm.xlu0 %91, %v82
    %v93 = vpop.permute.xlu0 %92
    %vm94 = vcmp.eq.s32.totalorder %v93, %v84
    %v95 = vsel %vm94, 1, 0
    %v96 = vcvt.s32.f32 %v95
    %97 = vset.pattern.permute.xlu0 2
    %98 = vperm.xlu0 %97, %v82
    %v99 = vpop.permute.xlu0 %98
    %vm100 = vcmp.eq.s32.totalorder %v99, %v84
    %v101 = vsel %vm100, 1, 0
    %v102 = vcvt.s32.f32 %v101
    %103 = vset.pattern.permute.xlu0 3
    %104 = vperm.xlu0 %103, %v82
    %v105 = vpop.permute.xlu0 %104
    %vm106 = vcmp.eq.s32.totalorder %v105, %v84
    %v107 = vsel %vm106, 1, 0
    %v108 = vcvt.s32.f32 %v107
    %109 = vset.pattern.permute.xlu0 4
    %110 = vperm.xlu0 %109, %v82
    %v111 = vpop.permute.xlu0 %110
    %vm112 = vcmp.eq.s32.totalorder %v111, %v84
    %v113 = vsel %vm112, 1, 0
    %v114 = vcvt.s32.f32 %v113
    %115 = vset.pattern.permute.xlu0 5
    %116 = vperm.xlu0 %115, %v82
    %v117 = vpop.permute.xlu0 %116
    %vm118 = vcmp.eq.s32.totalorder %v117, %v84
    %v119 = vsel %vm118, 1, 0
    %v120 = vcvt.s32.f32 %v119
    %121 = vset.pattern.permute.xlu0 6
    %122 = vperm.xlu0 %121, %v82
    %v123 = vpop.permute.xlu0 %122
    %vm124 = vcmp.eq.s32.totalorder %v123, %v84
    %v125 = vsel %vm124, 1, 0
    %v126 = vcvt.s32.f32 %v125
    %127 = vset.pattern.permute.xlu0 7
    %128 = vperm.xlu0 %127, %v82
    %v129 = vpop.permute.xlu0 %128
    %vm130 = vcmp.eq.s32.totalorder %v129, %v84
    %v131 = vsel %vm130, 1, 0
    %v132 = vcvt.s32.f32 %v131
    %v133 = vld [vmem:[#allocation3] sm:$0xff]
    %v134 = vld [vmem:[#allocation3 + $0x8] sm:$0xf]
    %vm135 = vcmask 97280
    %v137 = vsel %vm135, %v90, 0
    %v140 = vsel %vm135, %v96, 0
    %v143 = vsel %vm135, %v102, 0
    %v146 = vsel %vm135, %v108, 0
    %v149 = vsel %vm135, %v114, 0
    %v152 = vsel %vm135, %v120, 0
    %v155 = vsel %vm135, %v126, 0
    %v158 = vsel %vm135, %v132, 0
    %vm160 = vcmask 1043456
    %v162 = vsel %vm160, %v134, 0
    %164 = vmatprep.subr.mxu0 0.0
    %165 = vmatpush1.msra.mxu0 0.0
    %166 = vmatprep.subr.mxu0 0.0
    %167 = vmatpush1.msra.mxu0 0.0
    %168 = vmatprep.subr.mxu0 0.0
    %169 = vmatpush1.msra.mxu0 0.0
    %170 = vmatprep.subr.mxu0 0.0
    %171 = vmatpush1.msra.mxu0 0.0
    %172 = vmatprep.subr.mxu0 0.0
    %173 = vmatpush1.msra.mxu0 0.0
    %174 = vmatprep.subr.mxu0 0.0
    %175 = vmatpush1.msra.mxu0 0.0
    %176 = vmatprep.subr.mxu0 0.0
    %177 = vmatpush1.msra.mxu0 0.0
    %178 = vmatprep.subr.mxu0 0.0
    %179 = vmatpush1.msra.mxu0 0.0
    %180 = vmatprep.subr.mxu0 0.0
    %181 = vmatpush1.msra.mxu0 0.0
    %182 = vmatprep.subr.mxu0 0.0
    %183 = vmatpush1.msra.mxu0 0.0
    %184 = vmatprep.subr.mxu0 0.0
    %185 = vmatpush1.msra.mxu0 0.0
    %186 = vmatprep.subr.mxu0 0.0
    %187 = vmatpush1.msra.mxu0 0.0
    %188 = vmatprep.subr.mxu0 0.0
    %189 = vmatpush1.msra.mxu0 0.0
    %190 = vmatprep.subr.mxu0 0.0
    %191 = vmatpush1.msra.mxu0 0.0
    %192 = vmatprep.subr.mxu0 0.0
    %193 = vmatpush1.msra.mxu0 %v162
    %194 = vmatprep.subr.mxu0 0.0
    %195 = vmatpush1.msra.mxu0 %v133
    %196 = vmatprep.subr.mxu0 0.0
    %197 = vmatpush2.msra.mxu0 0.0
    %198 = vmatprep.subr.mxu0 0.0
    %199 = vmatpush2.msra.mxu0 0.0
    %200 = vmatprep.subr.mxu0 0.0
    %201 = vmatpush2.msra.mxu0 0.0
    %202 = vmatprep.subr.mxu0 0.0
    %203 = vmatpush2.msra.mxu0 0.0
    %204 = vmatprep.subr.mxu0 0.0
    %205 = vmatpush2.msra.mxu0 0.0
    %206 = vmatprep.subr.mxu0 0.0
    %207 = vmatpush2.msra.mxu0 0.0
    %208 = vmatprep.subr.mxu0 0.0
    %209 = vmatpush2.msra.mxu0 0.0
    %210 = vmatprep.subr.mxu0 0.0
    %211 = vmatpush2.msra.mxu0 0.0
    %212 = vmatprep.subr.mxu0 0.0
    %213 = vmatpush2.msra.mxu0 0.0
    %214 = vmatprep.subr.mxu0 0.0
    %215 = vmatpush2.msra.mxu0 0.0
    %216 = vmatprep.subr.mxu0 0.0
    %217 = vmatpush2.msra.mxu0 0.0
    %218 = vmatprep.subr.mxu0 0.0
    %219 = vmatpush2.msra.mxu0 0.0
    %220 = vmatprep.subr.mxu0 0.0
    %221 = vmatpush2.msra.mxu0 0.0
    %222 = vmatprep.subr.mxu0 0.0
    %223 = vmatpush2.msra.mxu0 0.0
    %224 = vmatprep.subr.mxu0 0.0
    %225 = vmatpush2.msra.mxu0 0.0
    %226 = vmatprep.subr.mxu0 0.0
    %227 = vmatpush2.msra.mxu0 0.0
    %228 = vmatprep.mubr.f32.mxu0 0.0
    %229 = vmatmul.mubr.f32.gmra.mxu0 %v137
    %v230 = vpop.f32.mrf.mxu0
    %v231 = vadd.f32 0.0, %v230
    %v232 = vpop.f32.mrf.mxu0
    %233 = vmatprep.mubr.f32.mxu0 0.0
    %234 = vmatmul.mubr.f32.gmra.mxu0 %v140
    %v235 = vpop.f32.mrf.mxu0
    %v236 = vadd.f32 0.0, %v235
    %v237 = vpop.f32.mrf.mxu0
    %238 = vmatprep.mubr.f32.mxu0 0.0
    %239 = vmatmul.mubr.f32.gmra.mxu0 %v143
    %v240 = vpop.f32.mrf.mxu0
    %v241 = vadd.f32 0.0, %v240
    %v242 = vpop.f32.mrf.mxu0
    %243 = vmatprep.mubr.f32.mxu0 0.0
    %244 = vmatmul.mubr.f32.gmra.mxu0 %v146
    %v245 = vpop.f32.mrf.mxu0
    %v246 = vadd.f32 0.0, %v245
    %v247 = vpop.f32.mrf.mxu0
    %248 = vmatprep.mubr.f32.mxu0 0.0
    %249 = vmatmul.mubr.f32.gmra.mxu0 %v149
    %v250 = vpop.f32.mrf.mxu0
    %v251 = vadd.f32 0.0, %v250
    %v252 = vpop.f32.mrf.mxu0
    %253 = vmatprep.mubr.f32.mxu0 0.0
    %254 = vmatmul.mubr.f32.gmra.mxu0 %v152
    %v255 = vpop.f32.mrf.mxu0
    %v256 = vadd.f32 0.0, %v255
    %v257 = vpop.f32.mrf.mxu0
    %258 = vmatprep.mubr.f32.mxu0 0.0
    %259 = vmatmul.mubr.f32.gmra.mxu0 %v155
    %v260 = vpop.f32.mrf.mxu0
    %v261 = vadd.f32 0.0, %v260
    %v262 = vpop.f32.mrf.mxu0
    %263 = vmatprep.mubr.f32.mxu0 0.0
    %264 = vmatmul.mubr.f32.gmra.mxu0 %v158
    %v265 = vpop.f32.mrf.mxu0
    %v266 = vadd.f32 0.0, %v265
    %v267 = vpop.f32.mrf.mxu0
    %268 = vdwg.mxu0
    %v269 = vld [vmem:[#allocation6] sm:$0xff]
    %v270 = vld [vmem:[#allocation6 + $0x8] sm:$0xff]
    %v271 = vld [vmem:[#allocation6 + $0x10] sm:$0xff]
    %v272 = vld [vmem:[#allocation6 + $0x18] sm:$0xff]
    %v273 = vld [vmem:[#allocation6 + $0x20] sm:$0xff]
    %v274 = vld [vmem:[#allocation6 + $0x28] sm:$0xff]
    %v275 = vld [vmem:[#allocation6 + $0x30] sm:$0xff]
    %v276 = vld [vmem:[#allocation6 + $0x38] sm:$0xff]
    %v277 = vld [vmem:[#allocation6 + $0x40] sm:$0xff]
    %v278 = vld [vmem:[#allocation6 + $0x48] sm:$0xff]
    %v279 = vld [vmem:[#allocation6 + $0x50] sm:$0xff]
    %v280 = vld [vmem:[#allocation6 + $0x58] sm:$0xff]
    %v281 = vld [vmem:[#allocation6 + $0x60] sm:$0xff]
    %v282 = vld [vmem:[#allocation6 + $0x68] sm:$0xff]
    %v283 = vld [vmem:[#allocation6 + $0x70] sm:$0xff]
    %v284 = vld [vmem:[#allocation6 + $0x78] sm:$0xff]
    %v285 = vld [vmem:[%s3] sm:$0x1]
    %v286 = vlaneseq
    %v287 = vshrl.u32 %v286, 7
    %v288 = vsub.s32 0, %v287
    %v289 = vrot.slane %v285, %v288
    %v290 = vld [vmem:[%s3 + $0x1] sm:$0x1]
    %v291 = vlaneseq
    %v292 = vshrl.u32 %v291, 7
    %v293 = vsub.s32 0, %v292
    %v294 = vrot.slane %v290, %v293
    %vm295 = vcmask 261120
    %v296 = vsel %vm295, %v231, 0.0
    %vm297 = vcmask 523264
    %v299 = vsel %vm297, %v296, 0
    %301 = vmatprep.subr.mxu0 0.0
    %302 = vmatpush1.msra.mxu0 0.0
    %303 = vmatprep.subr.mxu0 0.0
    %304 = vmatpush1.msra.mxu0 0.0
    %305 = vmatprep.subr.mxu0 0.0
    %306 = vmatpush1.msra.mxu0 0.0
    %307 = vmatprep.subr.mxu0 0.0
    %308 = vmatpush1.msra.mxu0 0.0
    %309 = vmatprep.subr.mxu0 0.0
    %310 = vmatpush1.msra.mxu0 0.0
    %311 = vmatprep.subr.mxu0 0.0
    %312 = vmatpush1.msra.mxu0 0.0
    %313 = vmatprep.subr.mxu0 0.0
    %314 = vmatpush1.msra.mxu0 0.0
    %315 = vmatprep.subr.mxu0 0.0
    %316 = vmatpush1.msra.mxu0 0.0
    %317 = vmatprep.subr.mxu0 %v284
    %318 = vmatpush1.msra.mxu0 %v283
    %319 = vmatprep.subr.mxu0 %v282
    %320 = vmatpush1.msra.mxu0 %v281
    %321 = vmatprep.subr.mxu0 %v280
    %322 = vmatpush1.msra.mxu0 %v279
    %323 = vmatprep.subr.mxu0 %v278
    %324 = vmatpush1.msra.mxu0 %v277
    %325 = vmatprep.subr.mxu0 %v276
    %326 = vmatpush1.msra.mxu0 %v275
    %327 = vmatprep.subr.mxu0 %v274
    %328 = vmatpush1.msra.mxu0 %v273
    %329 = vmatprep.subr.mxu0 %v272
    %330 = vmatpush1.msra.mxu0 %v271
    %331 = vmatprep.subr.mxu0 %v270
    %332 = vmatpush1.msra.mxu0 %v269
    %333 = vmatprep.subr.mxu0 0.0
    %334 = vmatpush2.msra.mxu0 0.0
    %335 = vmatprep.subr.mxu0 0.0
    %336 = vmatpush2.msra.mxu0 0.0
    %337 = vmatprep.subr.mxu0 0.0
    %338 = vmatpush2.msra.mxu0 0.0
    %339 = vmatprep.subr.mxu0 0.0
    %340 = vmatpush2.msra.mxu0 0.0
    %341 = vmatprep.subr.mxu0 0.0
    %342 = vmatpush2.msra.mxu0 0.0
    %343 = vmatprep.subr.mxu0 0.0
    %344 = vmatpush2.msra.mxu0 0.0
    %345 = vmatprep.subr.mxu0 0.0
    %346 = vmatpush2.msra.mxu0 0.0
    %347 = vmatprep.subr.mxu0 0.0
    %348 = vmatpush2.msra.mxu0 0.0
    %349 = vmatprep.subr.mxu0 0.0
    %350 = vmatpush2.msra.mxu0 0.0
    %351 = vmatprep.subr.mxu0 0.0
    %352 = vmatpush2.msra.mxu0 0.0
    %353 = vmatprep.subr.mxu0 0.0
    %354 = vmatpush2.msra.mxu0 0.0
    %355 = vmatprep.subr.mxu0 0.0
    %356 = vmatpush2.msra.mxu0 0.0
    %357 = vmatprep.subr.mxu0 0.0
    %358 = vmatpush2.msra.mxu0 0.0
    %359 = vmatprep.subr.mxu0 0.0
    %360 = vmatpush2.msra.mxu0 0.0
    %361 = vmatprep.subr.mxu0 0.0
    %362 = vmatpush2.msra.mxu0 0.0
    %363 = vmatprep.subr.mxu0 0.0
    %364 = vmatpush2.msra.mxu0 0.0
    %365 = vmatprep.mubr.f32.mxu0 0.0
    %366 = vmatmul.mubr.f32.gmra.mxu0 %v299
    %v367 = vpop.f32.mrf.mxu0
    %v368 = vadd.f32 0.0, %v367
    %v369 = vpop.f32.mrf.mxu0
    %370 = vdwg.mxu0
    %v371 = vadd.f32 %v368, %v289
    %v372 = vxor.u32 %v371, 2147483648
    %v373 = vmul.f32 %v372, 1.442695
    %v374 = vpow.pop %v373
    %v375 = vadd.f32 %v374, 1.0
    %v376 = vrcp.pop %v375
    %v377 = vmul.f32 1.0, %v376
    %v378 = vtanh.pop %v371
    %v379 = vmul.f32 %v377, 0.0
    %381 = vrot.lane.b32.xlu0 %v378, 64
    %v382 = vpop.permute.xlu0 %381
    %v384 = vmul.f32 %v377, %v382
    %386 = vrot.lane.b32.xlu0 %v384, 32
    %v387 = vpop.permute.xlu0 %386
    %v389 = vadd.f32 %v379, %v387
    %v390 = vtanh.pop %v389
    %392 = vrot.lane.b32.xlu0 %v390, 64
    %v393 = vpop.permute.xlu0 %392
    %v395 = vmul.f32 %v377, %v393
    %397 = vrot.lane.b32.xlu0 %v395, 64
    %v398 = vpop.permute.xlu0 %397
    %v400 = vsel %vm295, %v236, %v398
    %401 = vrot.lane.b32.xlu0 %v395, 32
    %v402 = vpop.permute.xlu0 %401
    %v404 = vsel %vm295, %v402, 0.0
    %v406 = vsel %vm297, %v400, 0
    %v409 = vsel %vm297, %v404, 0
    %411 = vmatprep.subr.mxu0 0.0
    %412 = vmatpush1.msra.mxu0 0.0
    %413 = vmatprep.subr.mxu0 0.0
    %414 = vmatpush1.msra.mxu0 0.0
    %415 = vmatprep.subr.mxu0 0.0
    %416 = vmatpush1.msra.mxu0 0.0
    %417 = vmatprep.subr.mxu0 0.0
    %418 = vmatpush1.msra.mxu0 0.0
    %419 = vmatprep.subr.mxu0 0.0
    %420 = vmatpush1.msra.mxu0 0.0
    %421 = vmatprep.subr.mxu0 0.0
    %422 = vmatpush1.msra.mxu0 0.0
    %423 = vmatprep.subr.mxu0 0.0
    %424 = vmatpush1.msra.mxu0 0.0
    %425 = vmatprep.subr.mxu0 0.0
    %426 = vmatpush1.msra.mxu0 0.0
    %427 = vmatprep.subr.mxu0 %v284
    %428 = vmatpush1.msra.mxu0 %v283
    %429 = vmatprep.subr.mxu0 %v282
    %430 = vmatpush1.msra.mxu0 %v281
    %431 = vmatprep.subr.mxu0 %v280
    %432 = vmatpush1.msra.mxu0 %v279
    %433 = vmatprep.subr.mxu0 %v278
    %434 = vmatpush1.msra.mxu0 %v277
    %435 = vmatprep.subr.mxu0 %v276
    %436 = vmatpush1.msra.mxu0 %v275
    %437 = vmatprep.subr.mxu0 %v274
    %438 = vmatpush1.msra.mxu0 %v273
    %439 = vmatprep.subr.mxu0 %v272
    %440 = vmatpush1.msra.mxu0 %v271
    %441 = vmatprep.subr.mxu0 %v270
    %442 = vmatpush1.msra.mxu0 %v269
    %443 = vmatprep.subr.mxu0 0.0
    %444 = vmatpush2.msra.mxu0 0.0
    %445 = vmatprep.subr.mxu0 0.0
    %446 = vmatpush2.msra.mxu0 0.0
    %447 = vmatprep.subr.mxu0 0.0
    %448 = vmatpush2.msra.mxu0 0.0
    %449 = vmatprep.subr.mxu0 0.0
    %450 = vmatpush2.msra.mxu0 0.0
    %451 = vmatprep.subr.mxu0 0.0
    %452 = vmatpush2.msra.mxu0 0.0
    %453 = vmatprep.subr.mxu0 0.0
    %454 = vmatpush2.msra.mxu0 0.0
    %455 = vmatprep.subr.mxu0 0.0
    %456 = vmatpush2.msra.mxu0 0.0
    %457 = vmatprep.subr.mxu0 0.0
    %458 = vmatpush2.msra.mxu0 0.0
    %459 = vmatprep.subr.mxu0 0.0
    %460 = vmatpush2.msra.mxu0 0.0
    %461 = vmatprep.subr.mxu0 0.0
    %462 = vmatpush2.msra.mxu0 0.0
    %463 = vmatprep.subr.mxu0 0.0
    %464 = vmatpush2.msra.mxu0 0.0
    %465 = vmatprep.subr.mxu0 0.0
    %466 = vmatpush2.msra.mxu0 0.0
    %467 = vmatprep.subr.mxu0 0.0
    %468 = vmatpush2.msra.mxu0 0.0
    %469 = vmatprep.subr.mxu0 0.0
    %470 = vmatpush2.msra.mxu0 0.0
    %471 = vmatprep.subr.mxu0 0.0
    %472 = vmatpush2.msra.mxu0 0.0
    %473 = vmatprep.subr.mxu0 0.0
    %474 = vmatpush2.msra.mxu0 0.0
    %475 = vmatprep.mubr.f32.mxu0 0.0
    %476 = vmatmul.mubr.f32.gmra.mxu0 %v406
    %v477 = vpop.f32.mrf.mxu0
    %v478 = vadd.f32 0.0, %v477
    %v479 = vpop.f32.mrf.mxu0
    %480 = vmatprep.mubr.f32.mxu0 0.0
    %481 = vmatmul.mubr.f32.gmra.mxu0 %v409
    %v482 = vpop.f32.mrf.mxu0
    %v483 = vpop.f32.mrf.mxu0
    %v484 = vadd.f32 0.0, %v483
    %485 = vdwg.mxu0
    %v486 = vadd.f32 %v478, %v289
    %v487 = vxor.u32 %v486, 2147483648
    %v488 = vmul.f32 %v487, 1.442695
    %v489 = vpow.pop %v488
    %v490 = vadd.f32 %v489, 1.0
    %v491 = vrcp.pop %v490
    %v492 = vmul.f32 1.0, %v491
    %v493 = vtanh.pop %v486
    %v494 = vmul.f32 %v492, %v389
    %496 = vrot.lane.b32.xlu0 %v493, 64
    %v497 = vpop.permute.xlu0 %496
    %v499 = vmul.f32 %v492, %v497
    %501 = vrot.lane.b32.xlu0 %v499, 32
    %v502 = vpop.permute.xlu0 %501
    %v504 = vadd.f32 %v494, %v502
    %v505 = vtanh.pop %v504
    %507 = vrot.lane.b32.xlu0 %v505, 64
    %v508 = vpop.permute.xlu0 %507
    %v510 = vmul.f32 %v492, %v508
    %v511 = vadd.f32 %v484, %v294
    %v512 = vxor.u32 %v511, 2147483648
    %v513 = vmul.f32 %v512, 1.442695
    %v514 = vpow.pop %v513
    %v515 = vadd.f32 %v514, 1.0
    %v516 = vrcp.pop %v515
    %v517 = vmul.f32 1.0, %v516
    %v518 = vtanh.pop %v511
    %v519 = vmul.f32 %v517, 0.0
    %521 = vrot.lane.b32.xlu0 %v518, 64
    %v522 = vpop.permute.xlu0 %521
    %v524 = vmul.f32 %v517, %v522
    %526 = vrot.lane.b32.xlu0 %v524, 32
    %v527 = vpop.permute.xlu0 %526
    %v529 = vadd.f32 %v519, %v527
    %v530 = vtanh.pop %v529
    %532 = vrot.lane.b32.xlu0 %v530, 64
    %v533 = vpop.permute.xlu0 %532
    %v535 = vmul.f32 %v517, %v533
    %537 = vrot.lane.b32.xlu0 %v510, 64
    %v538 = vpop.permute.xlu0 %537
    %v540 = vsel %vm295, %v241, %v538
    %541 = vrot.lane.b32.xlu0 %v510, 32
    %v542 = vpop.permute.xlu0 %541
    %545 = vrot.lane.b32.xlu0 %v535, 64
    %v546 = vpop.permute.xlu0 %545
    %v548 = vsel %vm295, %v542, %v546
    %v550 = vsel %vm297, %v540, 0
    %v553 = vsel %vm297, %v548, 0
    %555 = vmatprep.subr.mxu0 0.0
    %556 = vmatpush1.msra.mxu0 0.0
    %557 = vmatprep.subr.mxu0 0.0
    %558 = vmatpush1.msra.mxu0 0.0
    %559 = vmatprep.subr.mxu0 0.0
    %560 = vmatpush1.msra.mxu0 0.0
    %561 = vmatprep.subr.mxu0 0.0
    %562 = vmatpush1.msra.mxu0 0.0
    %563 = vmatprep.subr.mxu0 0.0
    %564 = vmatpush1.msra.mxu0 0.0
    %565 = vmatprep.subr.mxu0 0.0
    %566 = vmatpush1.msra.mxu0 0.0
    %567 = vmatprep.subr.mxu0 0.0
    %568 = vmatpush1.msra.mxu0 0.0
    %569 = vmatprep.subr.mxu0 0.0
    %570 = vmatpush1.msra.mxu0 0.0
    %571 = vmatprep.subr.mxu0 %v284
    %572 = vmatpush1.msra.mxu0 %v283
    %573 = vmatprep.subr.mxu0 %v282
    %574 = vmatpush1.msra.mxu0 %v281
    %575 = vmatprep.subr.mxu0 %v280
    %576 = vmatpush1.msra.mxu0 %v279
    %577 = vmatprep.subr.mxu0 %v278
    %578 = vmatpush1.msra.mxu0 %v277
    %579 = vmatprep.subr.mxu0 %v276
    %580 = vmatpush1.msra.mxu0 %v275
    %581 = vmatprep.subr.mxu0 %v274
    %582 = vmatpush1.msra.mxu0 %v273
    %583 = vmatprep.subr.mxu0 %v272
    %584 = vmatpush1.msra.mxu0 %v271
    %585 = vmatprep.subr.mxu0 %v270
    %586 = vmatpush1.msra.mxu0 %v269
    %587 = vmatprep.subr.mxu0 0.0
    %588 = vmatpush2.msra.mxu0 0.0
    %589 = vmatprep.subr.mxu0 0.0
    %590 = vmatpush2.msra.mxu0 0.0
    %591 = vmatprep.subr.mxu0 0.0
    %592 = vmatpush2.msra.mxu0 0.0
    %593 = vmatprep.subr.mxu0 0.0
    %594 = vmatpush2.msra.mxu0 0.0
    %595 = vmatprep.subr.mxu0 0.0
    %596 = vmatpush2.msra.mxu0 0.0
    %597 = vmatprep.subr.mxu0 0.0
    %598 = vmatpush2.msra.mxu0 0.0
    %599 = vmatprep.subr.mxu0 0.0
    %600 = vmatpush2.msra.mxu0 0.0
    %601 = vmatprep.subr.mxu0 0.0
    %602 = vmatpush2.msra.mxu0 0.0
    %603 = vmatprep.subr.mxu0 0.0
    %604 = vmatpush2.msra.mxu0 0.0
    %605 = vmatprep.subr.mxu0 0.0
    %606 = vmatpush2.msra.mxu0 0.0
    %607 = vmatprep.subr.mxu0 0.0
    %608 = vmatpush2.msra.mxu0 0.0
    %609 = vmatprep.subr.mxu0 0.0
    %610 = vmatpush2.msra.mxu0 0.0
    %611 = vmatprep.subr.mxu0 0.0
    %612 = vmatpush2.msra.mxu0 0.0
    %613 = vmatprep.subr.mxu0 0.0
    %614 = vmatpush2.msra.mxu0 0.0
    %615 = vmatprep.subr.mxu0 0.0
    %616 = vmatpush2.msra.mxu0 0.0
    %617 = vmatprep.subr.mxu0 0.0
    %618 = vmatpush2.msra.mxu0 0.0
    %619 = vmatprep.mubr.f32.mxu0 0.0
    %620 = vmatmul.mubr.f32.gmra.mxu0 %v550
    %v621 = vpop.f32.mrf.mxu0
    %v622 = vadd.f32 0.0, %v621
    %v623 = vpop.f32.mrf.mxu0
    %624 = vmatprep.mubr.f32.mxu0 0.0
    %625 = vmatmul.mubr.f32.gmra.mxu0 %v553
    %v626 = vpop.f32.mrf.mxu0
    %v627 = vpop.f32.mrf.mxu0
    %v628 = vadd.f32 0.0, %v627
    %629 = vdwg.mxu0
    %v630 = vadd.f32 %v622, %v289
    %v631 = vxor.u32 %v630, 2147483648
    %v632 = vmul.f32 %v631, 1.442695
    %v633 = vpow.pop %v632
    %v634 = vadd.f32 %v633, 1.0
    %v635 = vrcp.pop %v634
    %v636 = vmul.f32 1.0, %v635
    %v637 = vtanh.pop %v630
    %v638 = vmul.f32 %v636, %v504
    %640 = vrot.lane.b32.xlu0 %v637, 64
    %v641 = vpop.permute.xlu0 %640
    %v643 = vmul.f32 %v636, %v641
    %645 = vrot.lane.b32.xlu0 %v643, 32
    %v646 = vpop.permute.xlu0 %645
    %v648 = vadd.f32 %v638, %v646
    %v649 = vtanh.pop %v648
    %651 = vrot.lane.b32.xlu0 %v649, 64
    %v652 = vpop.permute.xlu0 %651
    %v654 = vmul.f32 %v636, %v652
    %v655 = vadd.f32 %v628, %v294
    %v656 = vxor.u32 %v655, 2147483648
    %v657 = vmul.f32 %v656, 1.442695
    %v658 = vpow.pop %v657
    %v659 = vadd.f32 %v658, 1.0
    %v660 = vrcp.pop %v659
    %v661 = vmul.f32 1.0, %v660
    %v662 = vtanh.pop %v655
    %v663 = vmul.f32 %v661, %v529
    %665 = vrot.lane.b32.xlu0 %v662, 64
    %v666 = vpop.permute.xlu0 %665
    %v668 = vmul.f32 %v661, %v666
    %670 = vrot.lane.b32.xlu0 %v668, 32
    %v671 = vpop.permute.xlu0 %670
    %v673 = vadd.f32 %v663, %v671
    %v674 = vtanh.pop %v673
    %676 = vrot.lane.b32.xlu0 %v674, 64
    %v677 = vpop.permute.xlu0 %676
    %v679 = vmul.f32 %v661, %v677
    %681 = vrot.lane.b32.xlu0 %v654, 64
    %v682 = vpop.permute.xlu0 %681
    %v684 = vsel %vm295, %v246, %v682
    %685 = vrot.lane.b32.xlu0 %v654, 32
    %v686 = vpop.permute.xlu0 %685
    %689 = vrot.lane.b32.xlu0 %v679, 64
    %v690 = vpop.permute.xlu0 %689
    %v692 = vsel %vm295, %v686, %v690
    %v694 = vsel %vm297, %v684, 0
    %v697 = vsel %vm297, %v692, 0
    %699 = vmatprep.subr.mxu0 0.0
    %700 = vmatpush1.msra.mxu0 0.0
    %701 = vmatprep.subr.mxu0 0.0
    %702 = vmatpush1.msra.mxu0 0.0
    %703 = vmatprep.subr.mxu0 0.0
    %704 = vmatpush1.msra.mxu0 0.0
    %705 = vmatprep.subr.mxu0 0.0
    %706 = vmatpush1.msra.mxu0 0.0
    %707 = vmatprep.subr.mxu0 0.0
    %708 = vmatpush1.msra.mxu0 0.0
    %709 = vmatprep.subr.mxu0 0.0
    %710 = vmatpush1.msra.mxu0 0.0
    %711 = vmatprep.subr.mxu0 0.0
    %712 = vmatpush1.msra.mxu0 0.0
    %713 = vmatprep.subr.mxu0 0.0
    %714 = vmatpush1.msra.mxu0 0.0
    %715 = vmatprep.subr.mxu0 %v284
    %716 = vmatpush1.msra.mxu0 %v283
    %717 = vmatprep.subr.mxu0 %v282
    %718 = vmatpush1.msra.mxu0 %v281
    %719 = vmatprep.subr.mxu0 %v280
    %720 = vmatpush1.msra.mxu0 %v279
    %721 = vmatprep.subr.mxu0 %v278
    %722 = vmatpush1.msra.mxu0 %v277
    %723 = vmatprep.subr.mxu0 %v276
    %724 = vmatpush1.msra.mxu0 %v275
    %725 = vmatprep.subr.mxu0 %v274
    %726 = vmatpush1.msra.mxu0 %v273
    %727 = vmatprep.subr.mxu0 %v272
    %728 = vmatpush1.msra.mxu0 %v271
    %729 = vmatprep.subr.mxu0 %v270
    %730 = vmatpush1.msra.mxu0 %v269
    %731 = vmatprep.subr.mxu0 0.0
    %732 = vmatpush2.msra.mxu0 0.0
    %733 = vmatprep.subr.mxu0 0.0
    %734 = vmatpush2.msra.mxu0 0.0
    %735 = vmatprep.subr.mxu0 0.0
    %736 = vmatpush2.msra.mxu0 0.0
    %737 = vmatprep.subr.mxu0 0.0
    %738 = vmatpush2.msra.mxu0 0.0
    %739 = vmatprep.subr.mxu0 0.0
    %740 = vmatpush2.msra.mxu0 0.0
    %741 = vmatprep.subr.mxu0 0.0
    %742 = vmatpush2.msra.mxu0 0.0
    %743 = vmatprep.subr.mxu0 0.0
    %744 = vmatpush2.msra.mxu0 0.0
    %745 = vmatprep.subr.mxu0 0.0
    %746 = vmatpush2.msra.mxu0 0.0
    %747 = vmatprep.subr.mxu0 0.0
    %748 = vmatpush2.msra.mxu0 0.0
    %749 = vmatprep.subr.mxu0 0.0
    %750 = vmatpush2.msra.mxu0 0.0
    %751 = vmatprep.subr.mxu0 0.0
    %752 = vmatpush2.msra.mxu0 0.0
    %753 = vmatprep.subr.mxu0 0.0
    %754 = vmatpush2.msra.mxu0 0.0
    %755 = vmatprep.subr.mxu0 0.0
    %756 = vmatpush2.msra.mxu0 0.0
    %757 = vmatprep.subr.mxu0 0.0
    %758 = vmatpush2.msra.mxu0 0.0
    %759 = vmatprep.subr.mxu0 0.0
    %760 = vmatpush2.msra.mxu0 0.0
    %761 = vmatprep.subr.mxu0 0.0
    %762 = vmatpush2.msra.mxu0 0.0
    %763 = vmatprep.mubr.f32.mxu0 0.0
    %764 = vmatmul.mubr.f32.gmra.mxu0 %v694
    %v765 = vpop.f32.mrf.mxu0
    %v766 = vadd.f32 0.0, %v765
    %v767 = vpop.f32.mrf.mxu0
    %768 = vmatprep.mubr.f32.mxu0 0.0
    %769 = vmatmul.mubr.f32.gmra.mxu0 %v697
    %v770 = vpop.f32.mrf.mxu0
    %v771 = vpop.f32.mrf.mxu0
    %v772 = vadd.f32 0.0, %v771
    %773 = vdwg.mxu0
    %v774 = vadd.f32 %v766, %v289
    %v775 = vxor.u32 %v774, 2147483648
    %v776 = vmul.f32 %v775, 1.442695
    %v777 = vpow.pop %v776
    %v778 = vadd.f32 %v777, 1.0
    %v779 = vrcp.pop %v778
    %v780 = vmul.f32 1.0, %v779
    %v781 = vtanh.pop %v774
    %v782 = vmul.f32 %v780, %v648
    %784 = vrot.lane.b32.xlu0 %v781, 64
    %v785 = vpop.permute.xlu0 %784
    %v787 = vmul.f32 %v780, %v785
    %789 = vrot.lane.b32.xlu0 %v787, 32
    %v790 = vpop.permute.xlu0 %789
    %v792 = vadd.f32 %v782, %v790
    %v793 = vtanh.pop %v792
    %795 = vrot.lane.b32.xlu0 %v793, 64
    %v796 = vpop.permute.xlu0 %795
    %v798 = vmul.f32 %v780, %v796
    %v799 = vadd.f32 %v772, %v294
    %v800 = vxor.u32 %v799, 2147483648
    %v801 = vmul.f32 %v800, 1.442695
    %v802 = vpow.pop %v801
    %v803 = vadd.f32 %v802, 1.0
    %v804 = vrcp.pop %v803
    %v805 = vmul.f32 1.0, %v804
    %v806 = vtanh.pop %v799
    %v807 = vmul.f32 %v805, %v673
    %809 = vrot.lane.b32.xlu0 %v806, 64
    %v810 = vpop.permute.xlu0 %809
    %v812 = vmul.f32 %v805, %v810
    %814 = vrot.lane.b32.xlu0 %v812, 32
    %v815 = vpop.permute.xlu0 %814
    %v817 = vadd.f32 %v807, %v815
    %v818 = vtanh.pop %v817
    %820 = vrot.lane.b32.xlu0 %v818, 64
    %v821 = vpop.permute.xlu0 %820
    %v823 = vmul.f32 %v805, %v821
    %825 = vrot.lane.b32.xlu0 %v798, 64
    %v826 = vpop.permute.xlu0 %825
    %v828 = vsel %vm295, %v251, %v826
    %829 = vrot.lane.b32.xlu0 %v798, 32
    %v830 = vpop.permute.xlu0 %829
    %833 = vrot.lane.b32.xlu0 %v823, 64
    %v834 = vpop.permute.xlu0 %833
    %v836 = vsel %vm295, %v830, %v834
    %v838 = vsel %vm297, %v828, 0
    %v841 = vsel %vm297, %v836, 0
    %843 = vmatprep.subr.mxu0 0.0
    %844 = vmatpush1.msra.mxu0 0.0
    %845 = vmatprep.subr.mxu0 0.0
    %846 = vmatpush1.msra.mxu0 0.0
    %847 = vmatprep.subr.mxu0 0.0
    %848 = vmatpush1.msra.mxu0 0.0
    %849 = vmatprep.subr.mxu0 0.0
    %850 = vmatpush1.msra.mxu0 0.0
    %851 = vmatprep.subr.mxu0 0.0
    %852 = vmatpush1.msra.mxu0 0.0
    %853 = vmatprep.subr.mxu0 0.0
    %854 = vmatpush1.msra.mxu0 0.0
    %855 = vmatprep.subr.mxu0 0.0
    %856 = vmatpush1.msra.mxu0 0.0
    %857 = vmatprep.subr.mxu0 0.0
    %858 = vmatpush1.msra.mxu0 0.0
    %859 = vmatprep.subr.mxu0 %v284
    %860 = vmatpush1.msra.mxu0 %v283
    %861 = vmatprep.subr.mxu0 %v282
    %862 = vmatpush1.msra.mxu0 %v281
    %863 = vmatprep.subr.mxu0 %v280
    %864 = vmatpush1.msra.mxu0 %v279
    %865 = vmatprep.subr.mxu0 %v278
    %866 = vmatpush1.msra.mxu0 %v277
    %867 = vmatprep.subr.mxu0 %v276
    %868 = vmatpush1.msra.mxu0 %v275
    %869 = vmatprep.subr.mxu0 %v274
    %870 = vmatpush1.msra.mxu0 %v273
    %871 = vmatprep.subr.mxu0 %v272
    %872 = vmatpush1.msra.mxu0 %v271
    %873 = vmatprep.subr.mxu0 %v270
    %874 = vmatpush1.msra.mxu0 %v269
    %875 = vmatprep.subr.mxu0 0.0
    %876 = vmatpush2.msra.mxu0 0.0
    %877 = vmatprep.subr.mxu0 0.0
    %878 = vmatpush2.msra.mxu0 0.0
    %879 = vmatprep.subr.mxu0 0.0
    %880 = vmatpush2.msra.mxu0 0.0
    %881 = vmatprep.subr.mxu0 0.0
    %882 = vmatpush2.msra.mxu0 0.0
    %883 = vmatprep.subr.mxu0 0.0
    %884 = vmatpush2.msra.mxu0 0.0
    %885 = vmatprep.subr.mxu0 0.0
    %886 = vmatpush2.msra.mxu0 0.0
    %887 = vmatprep.subr.mxu0 0.0
    %888 = vmatpush2.msra.mxu0 0.0
    %889 = vmatprep.subr.mxu0 0.0
    %890 = vmatpush2.msra.mxu0 0.0
    %891 = vmatprep.subr.mxu0 0.0
    %892 = vmatpush2.msra.mxu0 0.0
    %893 = vmatprep.subr.mxu0 0.0
    %894 = vmatpush2.msra.mxu0 0.0
    %895 = vmatprep.subr.mxu0 0.0
    %896 = vmatpush2.msra.mxu0 0.0
    %897 = vmatprep.subr.mxu0 0.0
    %898 = vmatpush2.msra.mxu0 0.0
    %899 = vmatprep.subr.mxu0 0.0
    %900 = vmatpush2.msra.mxu0 0.0
    %901 = vmatprep.subr.mxu0 0.0
    %902 = vmatpush2.msra.mxu0 0.0
    %903 = vmatprep.subr.mxu0 0.0
    %904 = vmatpush2.msra.mxu0 0.0
    %905 = vmatprep.subr.mxu0 0.0
    %906 = vmatpush2.msra.mxu0 0.0
    %907 = vmatprep.mubr.f32.mxu0 0.0
    %908 = vmatmul.mubr.f32.gmra.mxu0 %v838
    %v909 = vpop.f32.mrf.mxu0
    %v910 = vadd.f32 0.0, %v909
    %v911 = vpop.f32.mrf.mxu0
    %912 = vmatprep.mubr.f32.mxu0 0.0
    %913 = vmatmul.mubr.f32.gmra.mxu0 %v841
    %v914 = vpop.f32.mrf.mxu0
    %v915 = vpop.f32.mrf.mxu0
    %v916 = vadd.f32 0.0, %v915
    %917 = vdwg.mxu0
    %v918 = vadd.f32 %v910, %v289
    %v919 = vxor.u32 %v918, 2147483648
    %v920 = vmul.f32 %v919, 1.442695
    %v921 = vpow.pop %v920
    %v922 = vadd.f32 %v921, 1.0
    %v923 = vrcp.pop %v922
    %v924 = vmul.f32 1.0, %v923
    %v925 = vtanh.pop %v918
    %v926 = vmul.f32 %v924, %v792
    %928 = vrot.lane.b32.xlu0 %v925, 64
    %v929 = vpop.permute.xlu0 %928
    %v931 = vmul.f32 %v924, %v929
    %933 = vrot.lane.b32.xlu0 %v931, 32
    %v934 = vpop.permute.xlu0 %933
    %v936 = vadd.f32 %v926, %v934
    %v937 = vtanh.pop %v936
    %939 = vrot.lane.b32.xlu0 %v937, 64
    %v940 = vpop.permute.xlu0 %939
    %v942 = vmul.f32 %v924, %v940
    %v943 = vadd.f32 %v916, %v294
    %v944 = vxor.u32 %v943, 2147483648
    %v945 = vmul.f32 %v944, 1.442695
    %v946 = vpow.pop %v945
    %v947 = vadd.f32 %v946, 1.0
    %v948 = vrcp.pop %v947
    %v949 = vmul.f32 1.0, %v948
    %v950 = vtanh.pop %v943
    %v951 = vmul.f32 %v949, %v817
    %953 = vrot.lane.b32.xlu0 %v950, 64
    %v954 = vpop.permute.xlu0 %953
    %v956 = vmul.f32 %v949, %v954
    %958 = vrot.lane.b32.xlu0 %v956, 32
    %v959 = vpop.permute.xlu0 %958
    %v961 = vadd.f32 %v951, %v959
    %v962 = vtanh.pop %v961
    %964 = vrot.lane.b32.xlu0 %v962, 64
    %v965 = vpop.permute.xlu0 %964
    %v967 = vmul.f32 %v949, %v965
    %969 = vrot.lane.b32.xlu0 %v942, 64
    %v970 = vpop.permute.xlu0 %969
    %v972 = vsel %vm295, %v256, %v970
    %973 = vrot.lane.b32.xlu0 %v942, 32
    %v974 = vpop.permute.xlu0 %973
    %977 = vrot.lane.b32.xlu0 %v967, 64
    %v978 = vpop.permute.xlu0 %977
    %v980 = vsel %vm295, %v974, %v978
    %v982 = vsel %vm297, %v972, 0
    %v985 = vsel %vm297, %v980, 0
    %987 = vmatprep.subr.mxu0 0.0
    %988 = vmatpush1.msra.mxu0 0.0
    %989 = vmatprep.subr.mxu0 0.0
    %990 = vmatpush1.msra.mxu0 0.0
    %991 = vmatprep.subr.mxu0 0.0
    %992 = vmatpush1.msra.mxu0 0.0
    %993 = vmatprep.subr.mxu0 0.0
    %994 = vmatpush1.msra.mxu0 0.0
    %995 = vmatprep.subr.mxu0 0.0
    %996 = vmatpush1.msra.mxu0 0.0
    %997 = vmatprep.subr.mxu0 0.0
    %998 = vmatpush1.msra.mxu0 0.0
    %999 = vmatprep.subr.mxu0 0.0
    %1000 = vmatpush1.msra.mxu0 0.0
    %1001 = vmatprep.subr.mxu0 0.0
    %1002 = vmatpush1.msra.mxu0 0.0
    %1003 = vmatprep.subr.mxu0 %v284
    %1004 = vmatpush1.msra.mxu0 %v283
    %1005 = vmatprep.subr.mxu0 %v282
    %1006 = vmatpush1.msra.mxu0 %v281
    %1007 = vmatprep.subr.mxu0 %v280
    %1008 = vmatpush1.msra.mxu0 %v279
    %1009 = vmatprep.subr.mxu0 %v278
    %1010 = vmatpush1.msra.mxu0 %v277
    %1011 = vmatprep.subr.mxu0 %v276
    %1012 = vmatpush1.msra.mxu0 %v275
    %1013 = vmatprep.subr.mxu0 %v274
    %1014 = vmatpush1.msra.mxu0 %v273
    %1015 = vmatprep.subr.mxu0 %v272
    %1016 = vmatpush1.msra.mxu0 %v271
    %1017 = vmatprep.subr.mxu0 %v270
    %1018 = vmatpush1.msra.mxu0 %v269
    %1019 = vmatprep.subr.mxu0 0.0
    %1020 = vmatpush2.msra.mxu0 0.0
    %1021 = vmatprep.subr.mxu0 0.0
    %1022 = vmatpush2.msra.mxu0 0.0
    %1023 = vmatprep.subr.mxu0 0.0
    %1024 = vmatpush2.msra.mxu0 0.0
    %1025 = vmatprep.subr.mxu0 0.0
    %1026 = vmatpush2.msra.mxu0 0.0
    %1027 = vmatprep.subr.mxu0 0.0
    %1028 = vmatpush2.msra.mxu0 0.0
    %1029 = vmatprep.subr.mxu0 0.0
    %1030 = vmatpush2.msra.mxu0 0.0
    %1031 = vmatprep.subr.mxu0 0.0
    %1032 = vmatpush2.msra.mxu0 0.0
    %1033 = vmatprep.subr.mxu0 0.0
    %1034 = vmatpush2.msra.mxu0 0.0
    %1035 = vmatprep.subr.mxu0 0.0
    %1036 = vmatpush2.msra.mxu0 0.0
    %1037 = vmatprep.subr.mxu0 0.0
    %1038 = vmatpush2.msra.mxu0 0.0
    %1039 = vmatprep.subr.mxu0 0.0
    %1040 = vmatpush2.msra.mxu0 0.0
    %1041 = vmatprep.subr.mxu0 0.0
    %1042 = vmatpush2.msra.mxu0 0.0
    %1043 = vmatprep.subr.mxu0 0.0
    %1044 = vmatpush2.msra.mxu0 0.0
    %1045 = vmatprep.subr.mxu0 0.0
    %1046 = vmatpush2.msra.mxu0 0.0
    %1047 = vmatprep.subr.mxu0 0.0
    %1048 = vmatpush2.msra.mxu0 0.0
    %1049 = vmatprep.subr.mxu0 0.0
    %1050 = vmatpush2.msra.mxu0 0.0
    %1051 = vmatprep.mubr.f32.mxu0 0.0
    %1052 = vmatmul.mubr.f32.gmra.mxu0 %v982
    %v1053 = vpop.f32.mrf.mxu0
    %v1054 = vadd.f32 0.0, %v1053
    %v1055 = vpop.f32.mrf.mxu0
    %1056 = vmatprep.mubr.f32.mxu0 0.0
    %1057 = vmatmul.mubr.f32.gmra.mxu0 %v985
    %v1058 = vpop.f32.mrf.mxu0
    %v1059 = vpop.f32.mrf.mxu0
    %v1060 = vadd.f32 0.0, %v1059
    %1061 = vdwg.mxu0
    %v1062 = vadd.f32 %v1054, %v289
    %v1063 = vxor.u32 %v1062, 2147483648
    %v1064 = vmul.f32 %v1063, 1.442695
    %v1065 = vpow.pop %v1064
    %v1066 = vadd.f32 %v1065, 1.0
    %v1067 = vrcp.pop %v1066
    %v1068 = vmul.f32 1.0, %v1067
    %v1069 = vtanh.pop %v1062
    %v1070 = vmul.f32 %v1068, %v936
    %1072 = vrot.lane.b32.xlu0 %v1069, 64
    %v1073 = vpop.permute.xlu0 %1072
    %v1075 = vmul.f32 %v1068, %v1073
    %1077 = vrot.lane.b32.xlu0 %v1075, 32
    %v1078 = vpop.permute.xlu0 %1077
    %v1080 = vadd.f32 %v1070, %v1078
    %v1081 = vtanh.pop %v1080
    %1083 = vrot.lane.b32.xlu0 %v1081, 64
    %v1084 = vpop.permute.xlu0 %1083
    %v1086 = vmul.f32 %v1068, %v1084
    %v1087 = vadd.f32 %v1060, %v294
    %v1088 = vxor.u32 %v1087, 2147483648
    %v1089 = vmul.f32 %v1088, 1.442695
    %v1090 = vpow.pop %v1089
    %v1091 = vadd.f32 %v1090, 1.0
    %v1092 = vrcp.pop %v1091
    %v1093 = vmul.f32 1.0, %v1092
    %v1094 = vtanh.pop %v1087
    %v1095 = vmul.f32 %v1093, %v961
    %1097 = vrot.lane.b32.xlu0 %v1094, 64
    %v1098 = vpop.permute.xlu0 %1097
    %v1100 = vmul.f32 %v1093, %v1098
    %1102 = vrot.lane.b32.xlu0 %v1100, 32
    %v1103 = vpop.permute.xlu0 %1102
    %v1105 = vadd.f32 %v1095, %v1103
    %v1106 = vtanh.pop %v1105
    %1108 = vrot.lane.b32.xlu0 %v1106, 64
    %v1109 = vpop.permute.xlu0 %1108
    %v1111 = vmul.f32 %v1093, %v1109
    %1113 = vrot.lane.b32.xlu0 %v1086, 64
    %v1114 = vpop.permute.xlu0 %1113
    %v1116 = vsel %vm295, %v261, %v1114
    %1117 = vrot.lane.b32.xlu0 %v1086, 32
    %v1118 = vpop.permute.xlu0 %1117
    %1121 = vrot.lane.b32.xlu0 %v1111, 64
    %v1122 = vpop.permute.xlu0 %1121
    %v1124 = vsel %vm295, %v1118, %v1122
    %v1126 = vsel %vm297, %v1116, 0
    %v1129 = vsel %vm297, %v1124, 0
    %1131 = vmatprep.subr.mxu0 0.0
    %1132 = vmatpush1.msra.mxu0 0.0
    %1133 = vmatprep.subr.mxu0 0.0
    %1134 = vmatpush1.msra.mxu0 0.0
    %1135 = vmatprep.subr.mxu0 0.0
    %1136 = vmatpush1.msra.mxu0 0.0
    %1137 = vmatprep.subr.mxu0 0.0
    %1138 = vmatpush1.msra.mxu0 0.0
    %1139 = vmatprep.subr.mxu0 0.0
    %1140 = vmatpush1.msra.mxu0 0.0
    %1141 = vmatprep.subr.mxu0 0.0
    %1142 = vmatpush1.msra.mxu0 0.0
    %1143 = vmatprep.subr.mxu0 0.0
    %1144 = vmatpush1.msra.mxu0 0.0
    %1145 = vmatprep.subr.mxu0 0.0
    %1146 = vmatpush1.msra.mxu0 0.0
    %1147 = vmatprep.subr.mxu0 %v284
    %1148 = vmatpush1.msra.mxu0 %v283
    %1149 = vmatprep.subr.mxu0 %v282
    %1150 = vmatpush1.msra.mxu0 %v281
    %1151 = vmatprep.subr.mxu0 %v280
    %1152 = vmatpush1.msra.mxu0 %v279
    %1153 = vmatprep.subr.mxu0 %v278
    %1154 = vmatpush1.msra.mxu0 %v277
    %1155 = vmatprep.subr.mxu0 %v276
    %1156 = vmatpush1.msra.mxu0 %v275
    %1157 = vmatprep.subr.mxu0 %v274
    %1158 = vmatpush1.msra.mxu0 %v273
    %1159 = vmatprep.subr.mxu0 %v272
    %1160 = vmatpush1.msra.mxu0 %v271
    %1161 = vmatprep.subr.mxu0 %v270
    %1162 = vmatpush1.msra.mxu0 %v269
    %1163 = vmatprep.subr.mxu0 0.0
    %1164 = vmatpush2.msra.mxu0 0.0
    %1165 = vmatprep.subr.mxu0 0.0
    %1166 = vmatpush2.msra.mxu0 0.0
    %1167 = vmatprep.subr.mxu0 0.0
    %1168 = vmatpush2.msra.mxu0 0.0
    %1169 = vmatprep.subr.mxu0 0.0
    %1170 = vmatpush2.msra.mxu0 0.0
    %1171 = vmatprep.subr.mxu0 0.0
    %1172 = vmatpush2.msra.mxu0 0.0
    %1173 = vmatprep.subr.mxu0 0.0
    %1174 = vmatpush2.msra.mxu0 0.0
    %1175 = vmatprep.subr.mxu0 0.0
    %1176 = vmatpush2.msra.mxu0 0.0
    %1177 = vmatprep.subr.mxu0 0.0
    %1178 = vmatpush2.msra.mxu0 0.0
    %1179 = vmatprep.subr.mxu0 0.0
    %1180 = vmatpush2.msra.mxu0 0.0
    %1181 = vmatprep.subr.mxu0 0.0
    %1182 = vmatpush2.msra.mxu0 0.0
    %1183 = vmatprep.subr.mxu0 0.0
    %1184 = vmatpush2.msra.mxu0 0.0
    %1185 = vmatprep.subr.mxu0 0.0
    %1186 = vmatpush2.msra.mxu0 0.0
    %1187 = vmatprep.subr.mxu0 0.0
    %1188 = vmatpush2.msra.mxu0 0.0
    %1189 = vmatprep.subr.mxu0 0.0
    %1190 = vmatpush2.msra.mxu0 0.0
    %1191 = vmatprep.subr.mxu0 0.0
    %1192 = vmatpush2.msra.mxu0 0.0
    %1193 = vmatprep.subr.mxu0 0.0
    %1194 = vmatpush2.msra.mxu0 0.0
    %1195 = vmatprep.mubr.f32.mxu0 0.0
    %1196 = vmatmul.mubr.f32.gmra.mxu0 %v1126
    %v1197 = vpop.f32.mrf.mxu0
    %v1198 = vadd.f32 0.0, %v1197
    %v1199 = vpop.f32.mrf.mxu0
    %1200 = vmatprep.mubr.f32.mxu0 0.0
    %1201 = vmatmul.mubr.f32.gmra.mxu0 %v1129
    %v1202 = vpop.f32.mrf.mxu0
    %v1203 = vpop.f32.mrf.mxu0
    %v1204 = vadd.f32 0.0, %v1203
    %1205 = vdwg.mxu0
    %v1206 = vadd.f32 %v1198, %v289
    %v1207 = vxor.u32 %v1206, 2147483648
    %v1208 = vmul.f32 %v1207, 1.442695
    %v1209 = vpow.pop %v1208
    %v1210 = vadd.f32 %v1209, 1.0
    %v1211 = vrcp.pop %v1210
    %v1212 = vmul.f32 1.0, %v1211
    %v1213 = vtanh.pop %v1206
    %v1214 = vmul.f32 %v1212, %v1080
    %1216 = vrot.lane.b32.xlu0 %v1213, 64
    %v1217 = vpop.permute.xlu0 %1216
    %v1219 = vmul.f32 %v1212, %v1217
    %1221 = vrot.lane.b32.xlu0 %v1219, 32
    %v1222 = vpop.permute.xlu0 %1221
    %v1224 = vadd.f32 %v1214, %v1222
    %v1225 = vtanh.pop %v1224
    %1227 = vrot.lane.b32.xlu0 %v1225, 64
    %v1228 = vpop.permute.xlu0 %1227
    %v1230 = vmul.f32 %v1212, %v1228
    %v1231 = vadd.f32 %v1204, %v294
    %v1232 = vxor.u32 %v1231, 2147483648
    %v1233 = vmul.f32 %v1232, 1.442695
    %v1234 = vpow.pop %v1233
    %v1235 = vadd.f32 %v1234, 1.0
    %v1236 = vrcp.pop %v1235
    %v1237 = vmul.f32 1.0, %v1236
    %v1238 = vtanh.pop %v1231
    %v1239 = vmul.f32 %v1237, %v1105
    %1241 = vrot.lane.b32.xlu0 %v1238, 64
    %v1242 = vpop.permute.xlu0 %1241
    %v1244 = vmul.f32 %v1237, %v1242
    %1246 = vrot.lane.b32.xlu0 %v1244, 32
    %v1247 = vpop.permute.xlu0 %1246
    %v1249 = vadd.f32 %v1239, %v1247
    %v1250 = vtanh.pop %v1249
    %1252 = vrot.lane.b32.xlu0 %v1250, 64
    %v1253 = vpop.permute.xlu0 %1252
    %v1255 = vmul.f32 %v1237, %v1253
    %1257 = vrot.lane.b32.xlu0 %v1230, 64
    %v1258 = vpop.permute.xlu0 %1257
    %v1260 = vsel %vm295, %v266, %v1258
    %1261 = vrot.lane.b32.xlu0 %v1230, 32
    %v1262 = vpop.permute.xlu0 %1261
    %1265 = vrot.lane.b32.xlu0 %v1255, 64
    %v1266 = vpop.permute.xlu0 %1265
    %v1268 = vsel %vm295, %v1262, %v1266
    %v1270 = vsel %vm297, %v1260, 0
    %v1273 = vsel %vm297, %v1268, 0
    %1275 = vmatprep.subr.mxu0 0.0
    %1276 = vmatpush1.msra.mxu0 0.0
    %1277 = vmatprep.subr.mxu0 0.0
    %1278 = vmatpush1.msra.mxu0 0.0
    %1279 = vmatprep.subr.mxu0 0.0
    %1280 = vmatpush1.msra.mxu0 0.0
    %1281 = vmatprep.subr.mxu0 0.0
    %1282 = vmatpush1.msra.mxu0 0.0
    %1283 = vmatprep.subr.mxu0 0.0
    %1284 = vmatpush1.msra.mxu0 0.0
    %1285 = vmatprep.subr.mxu0 0.0
    %1286 = vmatpush1.msra.mxu0 0.0
    %1287 = vmatprep.subr.mxu0 0.0
    %1288 = vmatpush1.msra.mxu0 0.0
    %1289 = vmatprep.subr.mxu0 0.0
    %1290 = vmatpush1.msra.mxu0 0.0
    %1291 = vmatprep.subr.mxu0 %v284
    %1292 = vmatpush1.msra.mxu0 %v283
    %1293 = vmatprep.subr.mxu0 %v282
    %1294 = vmatpush1.msra.mxu0 %v281
    %1295 = vmatprep.subr.mxu0 %v280
    %1296 = vmatpush1.msra.mxu0 %v279
    %1297 = vmatprep.subr.mxu0 %v278
    %1298 = vmatpush1.msra.mxu0 %v277
    %1299 = vmatprep.subr.mxu0 %v276
    %1300 = vmatpush1.msra.mxu0 %v275
    %1301 = vmatprep.subr.mxu0 %v274
    %1302 = vmatpush1.msra.mxu0 %v273
    %1303 = vmatprep.subr.mxu0 %v272
    %1304 = vmatpush1.msra.mxu0 %v271
    %1305 = vmatprep.subr.mxu0 %v270
    %1306 = vmatpush1.msra.mxu0 %v269
    %1307 = vmatprep.subr.mxu0 0.0
    %1308 = vmatpush2.msra.mxu0 0.0
    %1309 = vmatprep.subr.mxu0 0.0
    %1310 = vmatpush2.msra.mxu0 0.0
    %1311 = vmatprep.subr.mxu0 0.0
    %1312 = vmatpush2.msra.mxu0 0.0
    %1313 = vmatprep.subr.mxu0 0.0
    %1314 = vmatpush2.msra.mxu0 0.0
    %1315 = vmatprep.subr.mxu0 0.0
    %1316 = vmatpush2.msra.mxu0 0.0
    %1317 = vmatprep.subr.mxu0 0.0
    %1318 = vmatpush2.msra.mxu0 0.0
    %1319 = vmatprep.subr.mxu0 0.0
    %1320 = vmatpush2.msra.mxu0 0.0
    %1321 = vmatprep.subr.mxu0 0.0
    %1322 = vmatpush2.msra.mxu0 0.0
    %1323 = vmatprep.subr.mxu0 0.0
    %1324 = vmatpush2.msra.mxu0 0.0
    %1325 = vmatprep.subr.mxu0 0.0
    %1326 = vmatpush2.msra.mxu0 0.0
    %1327 = vmatprep.subr.mxu0 0.0
    %1328 = vmatpush2.msra.mxu0 0.0
    %1329 = vmatprep.subr.mxu0 0.0
    %1330 = vmatpush2.msra.mxu0 0.0
    %1331 = vmatprep.subr.mxu0 0.0
    %1332 = vmatpush2.msra.mxu0 0.0
    %1333 = vmatprep.subr.mxu0 0.0
    %1334 = vmatpush2.msra.mxu0 0.0
    %1335 = vmatprep.subr.mxu0 0.0
    %1336 = vmatpush2.msra.mxu0 0.0
    %1337 = vmatprep.subr.mxu0 0.0
    %1338 = vmatpush2.msra.mxu0 0.0
    %1339 = vmatprep.mubr.f32.mxu0 0.0
    %1340 = vmatmul.mubr.f32.gmra.mxu0 %v1270
    %v1341 = vpop.f32.mrf.mxu0
    %v1342 = vadd.f32 0.0, %v1341
    %v1343 = vpop.f32.mrf.mxu0
    %1344 = vmatprep.mubr.f32.mxu0 0.0
    %1345 = vmatmul.mubr.f32.gmra.mxu0 %v1273
    %v1346 = vpop.f32.mrf.mxu0
    %v1347 = vpop.f32.mrf.mxu0
    %v1348 = vadd.f32 0.0, %v1347
    %1349 = vdwg.mxu0
    %v1350 = vadd.f32 %v1342, %v289
    %v1351 = vxor.u32 %v1350, 2147483648
    %v1352 = vmul.f32 %v1351, 1.442695
    %v1353 = vpow.pop %v1352
    %v1354 = vadd.f32 %v1353, 1.0
    %v1355 = vrcp.pop %v1354
    %v1356 = vmul.f32 1.0, %v1355
    %v1357 = vtanh.pop %v1350
    %v1358 = vmul.f32 %v1356, %v1224
    %1360 = vrot.lane.b32.xlu0 %v1357, 64
    %v1361 = vpop.permute.xlu0 %1360
    %v1363 = vmul.f32 %v1356, %v1361
    %1365 = vrot.lane.b32.xlu0 %v1363, 32
    %v1366 = vpop.permute.xlu0 %1365
    %v1368 = vadd.f32 %v1358, %v1366
    %v1369 = vtanh.pop %v1368
    %1371 = vrot.lane.b32.xlu0 %v1369, 64
    %v1372 = vpop.permute.xlu0 %1371
    %v1374 = vmul.f32 %v1356, %v1372
    %v1375 = vadd.f32 %v1348, %v294
    %v1376 = vxor.u32 %v1375, 2147483648
    %v1377 = vmul.f32 %v1376, 1.442695
    %v1378 = vpow.pop %v1377
    %v1379 = vadd.f32 %v1378, 1.0
    %v1380 = vrcp.pop %v1379
    %v1381 = vmul.f32 1.0, %v1380
    %v1382 = vtanh.pop %v1375
    %v1383 = vmul.f32 %v1381, %v1249
    %1385 = vrot.lane.b32.xlu0 %v1382, 64
    %v1386 = vpop.permute.xlu0 %1385
    %v1388 = vmul.f32 %v1381, %v1386
    %1390 = vrot.lane.b32.xlu0 %v1388, 32
    %v1391 = vpop.permute.xlu0 %1390
    %v1393 = vadd.f32 %v1383, %v1391
    %v1394 = vtanh.pop %v1393
    %1396 = vrot.lane.b32.xlu0 %v1394, 64
    %v1397 = vpop.permute.xlu0 %1396
    %v1399 = vmul.f32 %v1381, %v1397
    %1401 = vrot.lane.b32.xlu0 %v1374, 32
    %v1402 = vpop.permute.xlu0 %1401
    %1405 = vrot.lane.b32.xlu0 %v1399, 64
    %v1406 = vpop.permute.xlu0 %1405
    %v1408 = vsel %vm295, %v1402, %v1406
    %v1410 = vsel %vm297, %v1408, 0
    %1412 = vmatprep.subr.mxu0 0.0
    %1413 = vmatpush1.msra.mxu0 0.0
    %1414 = vmatprep.subr.mxu0 0.0
    %1415 = vmatpush1.msra.mxu0 0.0
    %1416 = vmatprep.subr.mxu0 0.0
    %1417 = vmatpush1.msra.mxu0 0.0
    %1418 = vmatprep.subr.mxu0 0.0
    %1419 = vmatpush1.msra.mxu0 0.0
    %1420 = vmatprep.subr.mxu0 0.0
    %1421 = vmatpush1.msra.mxu0 0.0
    %1422 = vmatprep.subr.mxu0 0.0
    %1423 = vmatpush1.msra.mxu0 0.0
    %1424 = vmatprep.subr.mxu0 0.0
    %1425 = vmatpush1.msra.mxu0 0.0
    %1426 = vmatprep.subr.mxu0 0.0
    %1427 = vmatpush1.msra.mxu0 0.0
    %1428 = vmatprep.subr.mxu0 %v284
    %1429 = vmatpush1.msra.mxu0 %v283
    %1430 = vmatprep.subr.mxu0 %v282
    %1431 = vmatpush1.msra.mxu0 %v281
    %1432 = vmatprep.subr.mxu0 %v280
    %1433 = vmatpush1.msra.mxu0 %v279
    %1434 = vmatprep.subr.mxu0 %v278
    %1435 = vmatpush1.msra.mxu0 %v277
    %1436 = vmatprep.subr.mxu0 %v276
    %1437 = vmatpush1.msra.mxu0 %v275
    %1438 = vmatprep.subr.mxu0 %v274
    %1439 = vmatpush1.msra.mxu0 %v273
    %1440 = vmatprep.subr.mxu0 %v272
    %1441 = vmatpush1.msra.mxu0 %v271
    %1442 = vmatprep.subr.mxu0 %v270
    %1443 = vmatpush1.msra.mxu0 %v269
    %1444 = vmatprep.subr.mxu0 0.0
    %1445 = vmatpush2.msra.mxu0 0.0
    %1446 = vmatprep.subr.mxu0 0.0
    %1447 = vmatpush2.msra.mxu0 0.0
    %1448 = vmatprep.subr.mxu0 0.0
    %1449 = vmatpush2.msra.mxu0 0.0
    %1450 = vmatprep.subr.mxu0 0.0
    %1451 = vmatpush2.msra.mxu0 0.0
    %1452 = vmatprep.subr.mxu0 0.0
    %1453 = vmatpush2.msra.mxu0 0.0
    %1454 = vmatprep.subr.mxu0 0.0
    %1455 = vmatpush2.msra.mxu0 0.0
    %1456 = vmatprep.subr.mxu0 0.0
    %1457 = vmatpush2.msra.mxu0 0.0
    %1458 = vmatprep.subr.mxu0 0.0
    %1459 = vmatpush2.msra.mxu0 0.0
    %1460 = vmatprep.subr.mxu0 0.0
    %1461 = vmatpush2.msra.mxu0 0.0
    %1462 = vmatprep.subr.mxu0 0.0
    %1463 = vmatpush2.msra.mxu0 0.0
    %1464 = vmatprep.subr.mxu0 0.0
    %1465 = vmatpush2.msra.mxu0 0.0
    %1466 = vmatprep.subr.mxu0 0.0
    %1467 = vmatpush2.msra.mxu0 0.0
    %1468 = vmatprep.subr.mxu0 0.0
    %1469 = vmatpush2.msra.mxu0 0.0
    %1470 = vmatprep.subr.mxu0 0.0
    %1471 = vmatpush2.msra.mxu0 0.0
    %1472 = vmatprep.subr.mxu0 0.0
    %1473 = vmatpush2.msra.mxu0 0.0
    %1474 = vmatprep.subr.mxu0 0.0
    %1475 = vmatpush2.msra.mxu0 0.0
    %1476 = vmatprep.mubr.f32.mxu0 0.0
    %1477 = vmatmul.mubr.f32.gmra.mxu0 %v1410
    %v1478 = vpop.f32.mrf.mxu0
    %v1479 = vpop.f32.mrf.mxu0
    %v1480 = vadd.f32 0.0, %v1479
    %1481 = vdwg.mxu0
    %v1482 = vadd.f32 %v1480, %v294
    %v1483 = vxor.u32 %v1482, 2147483648
    %v1484 = vmul.f32 %v1483, 1.442695
    %v1485 = vpow.pop %v1484
    %v1486 = vadd.f32 %v1485, 1.0
    %v1487 = vrcp.pop %v1486
    %v1488 = vmul.f32 1.0, %v1487
    %v1489 = vtanh.pop %v1482
    %v1490 = vmul.f32 %v1488, %v1393
    %1492 = vrot.lane.b32.xlu0 %v1489, 64
    %v1493 = vpop.permute.xlu0 %1492
    %v1495 = vmul.f32 %v1488, %v1493
    %1497 = vrot.lane.b32.xlu0 %v1495, 32
    %v1498 = vpop.permute.xlu0 %1497
    %v1500 = vadd.f32 %v1490, %v1498
    %v1501 = vtanh.pop %v1500
    %1503 = vrot.lane.b32.xlu0 %v1501, 64
    %v1504 = vpop.permute.xlu0 %1503
    %v1506 = vmul.f32 %v1488, %v1504
    %v1507 = vmul.f32 %v535, %v535
    %1509 = vrot.lane.b32.xlu0 %v1507, 32
    %v1510 = vpop.permute.xlu0 %1509
    %v1512 = vsel %vm295, %v1510, 0.0
    %1513 = vadd.xlane.f32.xlu0 %v1512
    %v1514 = vpop.xlane.xlu0 %1513
    %v1515 = vmax.f32 %v1514, 1e-24
    %v1516 = vrsqrt.pop %v1515
    %v1517 = vmul.f32 %v535, %v1516
    %v1518 = vadd.f32 %v1517, 0.0
    %v1519 = vmul.f32 %v679, %v679
    %1521 = vrot.lane.b32.xlu0 %v1519, 32
    %v1522 = vpop.permute.xlu0 %1521
    %v1524 = vsel %vm295, %v1522, 0.0
    %1525 = vadd.xlane.f32.xlu0 %v1524
    %v1526 = vpop.xlane.xlu0 %1525
    %v1527 = vmax.f32 %v1526, 1e-24
    %v1528 = vrsqrt.pop %v1527
    %v1529 = vmul.f32 %v679, %v1528
    %v1530 = vadd.f32 %v1518, %v1529
    %v1531 = vmul.f32 %v823, %v823
    %1533 = vrot.lane.b32.xlu0 %v1531, 32
    %v1534 = vpop.permute.xlu0 %1533
    %v1536 = vsel %vm295, %v1534, 0.0
    %1537 = vadd.xlane.f32.xlu0 %v1536
    %v1538 = vpop.xlane.xlu0 %1537
    %v1539 = vmax.f32 %v1538, 1e-24
    %v1540 = vrsqrt.pop %v1539
    %v1541 = vmul.f32 %v823, %v1540
    %v1542 = vadd.f32 %v1530, %v1541
    %v1543 = vmul.f32 %v967, %v967
    %1545 = vrot.lane.b32.xlu0 %v1543, 32
    %v1546 = vpop.permute.xlu0 %1545
    %v1548 = vsel %vm295, %v1546, 0.0
    %1549 = vadd.xlane.f32.xlu0 %v1548
    %v1550 = vpop.xlane.xlu0 %1549
    %v1551 = vmax.f32 %v1550, 1e-24
    %v1552 = vrsqrt.pop %v1551
    %v1553 = vmul.f32 %v967, %v1552
    %v1554 = vadd.f32 %v1542, %v1553
    %v1555 = vmul.f32 %v1111, %v1111
    %1557 = vrot.lane.b32.xlu0 %v1555, 32
    %v1558 = vpop.permute.xlu0 %1557
    %v1560 = vsel %vm295, %v1558, 0.0
    %1561 = vadd.xlane.f32.xlu0 %v1560
    %v1562 = vpop.xlane.xlu0 %1561
    %v1563 = vmax.f32 %v1562, 1e-24
    %v1564 = vrsqrt.pop %v1563
    %v1565 = vmul.f32 %v1111, %v1564
    %v1566 = vadd.f32 %v1554, %v1565
    %v1567 = vmul.f32 %v1255, %v1255
    %1569 = vrot.lane.b32.xlu0 %v1567, 32
    %v1570 = vpop.permute.xlu0 %1569
    %v1572 = vsel %vm295, %v1570, 0.0
    %1573 = vadd.xlane.f32.xlu0 %v1572
    %v1574 = vpop.xlane.xlu0 %1573
    %v1575 = vmax.f32 %v1574, 1e-24
    %v1576 = vrsqrt.pop %v1575
    %v1577 = vmul.f32 %v1255, %v1576
    %v1578 = vadd.f32 %v1566, %v1577
    %v1579 = vmul.f32 %v1399, %v1399
    %1581 = vrot.lane.b32.xlu0 %v1579, 32
    %v1582 = vpop.permute.xlu0 %1581
    %v1584 = vsel %vm295, %v1582, 0.0
    %1585 = vadd.xlane.f32.xlu0 %v1584
    %v1586 = vpop.xlane.xlu0 %1585
    %v1587 = vmax.f32 %v1586, 1e-24
    %v1588 = vrsqrt.pop %v1587
    %v1589 = vmul.f32 %v1399, %v1588
    %v1590 = vadd.f32 %v1578, %v1589
    %v1591 = vmul.f32 %v1506, %v1506
    %1593 = vrot.lane.b32.xlu0 %v1591, 32
    %v1594 = vpop.permute.xlu0 %1593
    %v1596 = vsel %vm295, %v1594, 0.0
    %1597 = vadd.xlane.f32.xlu0 %v1596
    %v1598 = vpop.xlane.xlu0 %1597
    %v1599 = vmax.f32 %v1598, 1e-24
    %v1600 = vrsqrt.pop %v1599
    %v1601 = vmul.f32 %v1506, %v1600
    %v1602 = vadd.f32 %v1590, %v1601
    %1604 = vrot.lane.b32.xlu0 %v1517, 32
    %v1605 = vpop.permute.xlu0 %1604
    %1608 = vrot.lane.b32.xlu0 %v1529, 64
    %v1609 = vpop.permute.xlu0 %1608
    %1612 = vrot.lane.b32.xlu0 %v1541, 96
    %v1613 = vpop.permute.xlu0 %1612
    %1616 = vrot.lane.b32.xlu0 %v1565, 32
    %v1617 = vpop.permute.xlu0 %1616
    %1620 = vrot.lane.b32.xlu0 %v1577, 64
    %v1621 = vpop.permute.xlu0 %1620
    %1624 = vrot.lane.b32.xlu0 %v1589, 96
    %v1625 = vpop.permute.xlu0 %1624
    %v1627 = vsel %vm295, %v1605, %v1609
    %v1628 = vsel %vm297, %v1627, %v1613
    %vm1629 = vcmask 785408
    %v1630 = vsel %vm1629, %v1628, %v1553
    %v1631 = vsel %vm295, %v1617, %v1621
    %v1632 = vsel %vm297, %v1631, %v1625
    %v1633 = vsel %vm1629, %v1632, %v1601
    %1634 = vst [vmem:[#allocation9] sm:$0xff] %v1630
    %1635 = vst [vmem:[#allocation9 + $0x8] sm:$0xff] %v1633
    %v1636 = vmul.f32 %v1602, 0.125
    %v1637 = vmul.f32 %v1636, %v1636
    %1639 = vrot.lane.b32.xlu0 %v1637, 32
    %v1640 = vpop.permute.xlu0 %1639
    %v1642 = vsel %vm295, %v1640, 0.0
    %1643 = vadd.xlane.f32.xlu0 %v1642
    %v1644 = vpop.xlane.xlu0 %1643
    %v1645 = vmax.f32 %v1644, 1e-24
    %v1646 = vrsqrt.pop %v1645
    %v1647 = vmul.f32 %v1636, %v1646
    %v1648 = vld [vmem:[#allocation8] sm:$0xff]
    %v1649 = vld [vmem:[#allocation8 + $0x8] sm:$0xff]
    %v1650 = vld [vmem:[#allocation8 + $0x10] sm:$0xff]
    %v1651 = vld [vmem:[#allocation8 + $0x18] sm:$0xff]
    %v1652 = vld [vmem:[%s5] sm:$0x1]
    %v1654 = vlaneseq
    %v1655 = vshrl.u32 %v1654, 7
    %v1656 = vsub.s32 0, %v1655
    %v1657 = vrot.slane %v1652, %v1656
    %1660 = vrot.lane.b32.xlu0 %v1647, 32
    %v1661 = vpop.permute.xlu0 %1660
    %v1662 = vsel %vm295, %v1661, 0
    %1664 = vmatprep.subr.mxu0 0.0
    %1665 = vmatpush1.msra.mxu0 0.0
    %1666 = vmatprep.subr.mxu0 0.0
    %1667 = vmatpush1.msra.mxu0 0.0
    %1668 = vmatprep.subr.mxu0 0.0
    %1669 = vmatpush1.msra.mxu0 0.0
    %1670 = vmatprep.subr.mxu0 0.0
    %1671 = vmatpush1.msra.mxu0 0.0
    %1672 = vmatprep.subr.mxu0 0.0
    %1673 = vmatpush1.msra.mxu0 0.0
    %1674 = vmatprep.subr.mxu0 0.0
    %1675 = vmatpush1.msra.mxu0 0.0
    %1676 = vmatprep.subr.mxu0 0.0
    %1677 = vmatpush1.msra.mxu0 0.0
    %1678 = vmatprep.subr.mxu0 0.0
    %1679 = vmatpush1.msra.mxu0 0.0
    %1680 = vmatprep.subr.mxu0 0.0
    %1681 = vmatpush1.msra.mxu0 0.0
    %1682 = vmatprep.subr.mxu0 0.0
    %1683 = vmatpush1.msra.mxu0 0.0
    %1684 = vmatprep.subr.mxu0 0.0
    %1685 = vmatpush1.msra.mxu0 0.0
    %1686 = vmatprep.subr.mxu0 0.0
    %1687 = vmatpush1.msra.mxu0 0.0
    %1688 = vmatprep.subr.mxu0 0.0
    %1689 = vmatpush1.msra.mxu0 %v1651
    %1690 = vmatprep.subr.mxu0 0.0
    %1691 = vmatpush1.msra.mxu0 %v1650
    %1692 = vmatprep.subr.mxu0 0.0
    %1693 = vmatpush1.msra.mxu0 %v1649
    %1694 = vmatprep.subr.mxu0 0.0
    %1695 = vmatpush1.msra.mxu0 %v1648
    %1696 = vmatprep.subr.mxu0 0.0
    %1697 = vmatpush2.msra.mxu0 0.0
    %1698 = vmatprep.subr.mxu0 0.0
    %1699 = vmatpush2.msra.mxu0 0.0
    %1700 = vmatprep.subr.mxu0 0.0
    %1701 = vmatpush2.msra.mxu0 0.0
    %1702 = vmatprep.subr.mxu0 0.0
    %1703 = vmatpush2.msra.mxu0 0.0
    %1704 = vmatprep.subr.mxu0 0.0
    %1705 = vmatpush2.msra.mxu0 0.0
    %1706 = vmatprep.subr.mxu0 0.0
    %1707 = vmatpush2.msra.mxu0 0.0
    %1708 = vmatprep.subr.mxu0 0.0
    %1709 = vmatpush2.msra.mxu0 0.0
    %1710 = vmatprep.subr.mxu0 0.0
    %1711 = vmatpush2.msra.mxu0 0.0
    %1712 = vmatprep.subr.mxu0 0.0
    %1713 = vmatpush2.msra.mxu0 0.0
    %1714 = vmatprep.subr.mxu0 0.0
    %1715 = vmatpush2.msra.mxu0 0.0
    %1716 = vmatprep.subr.mxu0 0.0
    %1717 = vmatpush2.msra.mxu0 0.0
    %1718 = vmatprep.subr.mxu0 0.0
    %1719 = vmatpush2.msra.mxu0 0.0
    %1720 = vmatprep.subr.mxu0 0.0
    %1721 = vmatpush2.msra.mxu0 0.0
    %1722 = vmatprep.subr.mxu0 0.0
    %1723 = vmatpush2.msra.mxu0 0.0
    %1724 = vmatprep.subr.mxu0 0.0
    %1725 = vmatpush2.msra.mxu0 0.0
    %1726 = vmatprep.subr.mxu0 0.0
    %1727 = vmatpush2.msra.mxu0 0.0
    %1728 = vmatprep.mubr.f32.mxu0 0.0
    %1729 = vmatmul.mubr.f32.gmra.mxu0 %v1662
    %v1730 = vpop.f32.mrf.mxu0
    %v1731 = vadd.f32 %v1657, %v1730
    %v1732 = vpop.f32.mrf.mxu0
    %1733 = vdwg.mxu0
    %v1734 = vmax.f32 %v1731, 0.0
    %v1735 = vld [vmem:[%s6] sm:$0xff]
    %v1736 = vld [vmem:[%s6 + $0x8] sm:$0xff]
    %v1737 = vld [vmem:[%s6 + $0x10] sm:$0xff]
    %v1738 = vld [vmem:[%s6 + $0x18] sm:$0xff]
    %v1739 = vld [vmem:[%s6 + $0x20] sm:$0xff]
    %v1740 = vld [vmem:[%s6 + $0x28] sm:$0xff]
    %v1741 = vld [vmem:[%s6 + $0x30] sm:$0xff]
    %v1742 = vld [vmem:[%s6 + $0x38] sm:$0xff]
    %v1743 = vld [vmem:[%s7] sm:$0x1]
    %v1745 = vlaneseq
    %v1746 = vshrl.u32 %v1745, 7
    %v1747 = vsub.s32 0, %v1746
    %v1748 = vrot.slane %v1743, %v1747
    %v1751 = vsel %vm297, %v1734, 0
    %1753 = vmatprep.subr.mxu0 0.0
    %1754 = vmatpush1.msra.mxu0 0.0
    %1755 = vmatprep.subr.mxu0 0.0
    %1756 = vmatpush1.msra.mxu0 0.0
    %1757 = vmatprep.subr.mxu0 0.0
    %1758 = vmatpush1.msra.mxu0 0.0
    %1759 = vmatprep.subr.mxu0 0.0
    %1760 = vmatpush1.msra.mxu0 0.0
    %1761 = vmatprep.subr.mxu0 0.0
    %1762 = vmatpush1.msra.mxu0 0.0
    %1763 = vmatprep.subr.mxu0 0.0
    %1764 = vmatpush1.msra.mxu0 0.0
    %1765 = vmatprep.subr.mxu0 0.0
    %1766 = vmatpush1.msra.mxu0 0.0
    %1767 = vmatprep.subr.mxu0 0.0
    %1768 = vmatpush1.msra.mxu0 0.0
    %1769 = vmatprep.subr.mxu0 0.0
    %1770 = vmatpush1.msra.mxu0 %v1742
    %1771 = vmatprep.subr.mxu0 0.0
    %1772 = vmatpush1.msra.mxu0 %v1741
    %1773 = vmatprep.subr.mxu0 0.0
    %1774 = vmatpush1.msra.mxu0 %v1740
    %1775 = vmatprep.subr.mxu0 0.0
    %1776 = vmatpush1.msra.mxu0 %v1739
    %1777 = vmatprep.subr.mxu0 0.0
    %1778 = vmatpush1.msra.mxu0 %v1738
    %1779 = vmatprep.subr.mxu0 0.0
    %1780 = vmatpush1.msra.mxu0 %v1737
    %1781 = vmatprep.subr.mxu0 0.0
    %1782 = vmatpush1.msra.mxu0 %v1736
    %1783 = vmatprep.subr.mxu0 0.0
    %1784 = vmatpush1.msra.mxu0 %v1735
    %1785 = vmatprep.subr.mxu0 0.0
    %1786 = vmatpush2.msra.mxu0 0.0
    %1787 = vmatprep.subr.mxu0 0.0
    %1788 = vmatpush2.msra.mxu0 0.0
    %1789 = vmatprep.subr.mxu0 0.0
    %1790 = vmatpush2.msra.mxu0 0.0
    %1791 = vmatprep.subr.mxu0 0.0
    %1792 = vmatpush2.msra.mxu0 0.0
    %1793 = vmatprep.subr.mxu0 0.0
    %1794 = vmatpush2.msra.mxu0 0.0
    %1795 = vmatprep.subr.mxu0 0.0
    %1796 = vmatpush2.msra.mxu0 0.0
    %1797 = vmatprep.subr.mxu0 0.0
    %1798 = vmatpush2.msra.mxu0 0.0
    %1799 = vmatprep.subr.mxu0 0.0
    %1800 = vmatpush2.msra.mxu0 0.0
    %1801 = vmatprep.subr.mxu0 0.0
    %1802 = vmatpush2.msra.mxu0 0.0
    %1803 = vmatprep.subr.mxu0 0.0
    %1804 = vmatpush2.msra.mxu0 0.0
    %1805 = vmatprep.subr.mxu0 0.0
    %1806 = vmatpush2.msra.mxu0 0.0
    %1807 = vmatprep.subr.mxu0 0.0
    %1808 = vmatpush2.msra.mxu0 0.0
    %1809 = vmatprep.subr.mxu0 0.0
    %1810 = vmatpush2.msra.mxu0 0.0
    %1811 = vmatprep.subr.mxu0 0.0
    %1812 = vmatpush2.msra.mxu0 0.0
    %1813 = vmatprep.subr.mxu0 0.0
    %1814 = vmatpush2.msra.mxu0 0.0
    %1815 = vmatprep.subr.mxu0 0.0
    %1816 = vmatpush2.msra.mxu0 0.0
    %1817 = vmatprep.mubr.f32.mxu0 0.0
    %1818 = vmatmul.mubr.f32.gmra.mxu0 %v1751
    %v1819 = vpop.f32.mrf.mxu0
    %v1820 = vadd.f32 %v1748, %v1819
    %v1821 = vpop.f32.mrf.mxu0
    %1822 = vdwg.mxu0
    %v1823 = vmax.f32 %v1820, 0.0
    %v1824 = vld [vmem:[%s8] sm:$0xff]
    %v1825 = vld [vmem:[%s8 + $0x8] sm:$0xff]
    %v1826 = vld [vmem:[%s8 + $0x10] sm:$0xff]
    %v1827 = vld [vmem:[%s8 + $0x18] sm:$0xff]
    %v1828 = vld [vmem:[%s8 + $0x20] sm:$0xff]
    %v1829 = vld [vmem:[%s8 + $0x28] sm:$0xff]
    %v1830 = vld [vmem:[%s8 + $0x30] sm:$0xff]
    %v1831 = vld [vmem:[%s8 + $0x38] sm:$0xff]
    %v1832 = vld [vmem:[#allocation2] sm:$0x1]
    %v1834 = vlaneseq
    %v1835 = vshrl.u32 %v1834, 7
    %v1836 = vsub.s32 0, %v1835
    %v1837 = vrot.slane %v1832, %v1836
    %v1840 = vsel %vm297, %v1823, 0
    %1842 = vmatprep.subr.mxu0 0.0
    %1843 = vmatpush1.msra.mxu0 0.0
    %1844 = vmatprep.subr.mxu0 0.0
    %1845 = vmatpush1.msra.mxu0 0.0
    %1846 = vmatprep.subr.mxu0 0.0
    %1847 = vmatpush1.msra.mxu0 0.0
    %1848 = vmatprep.subr.mxu0 0.0
    %1849 = vmatpush1.msra.mxu0 0.0
    %1850 = vmatprep.subr.mxu0 0.0
    %1851 = vmatpush1.msra.mxu0 0.0
    %1852 = vmatprep.subr.mxu0 0.0
    %1853 = vmatpush1.msra.mxu0 0.0
    %1854 = vmatprep.subr.mxu0 0.0
    %1855 = vmatpush1.msra.mxu0 0.0
    %1856 = vmatprep.subr.mxu0 0.0
    %1857 = vmatpush1.msra.mxu0 0.0
    %1858 = vmatprep.subr.mxu0 0.0
    %1859 = vmatpush1.msra.mxu0 %v1831
    %1860 = vmatprep.subr.mxu0 0.0
    %1861 = vmatpush1.msra.mxu0 %v1830
    %1862 = vmatprep.subr.mxu0 0.0
    %1863 = vmatpush1.msra.mxu0 %v1829
    %1864 = vmatprep.subr.mxu0 0.0
    %1865 = vmatpush1.msra.mxu0 %v1828
    %1866 = vmatprep.subr.mxu0 0.0
    %1867 = vmatpush1.msra.mxu0 %v1827
    %1868 = vmatprep.subr.mxu0 0.0
    %1869 = vmatpush1.msra.mxu0 %v1826
    %1870 = vmatprep.subr.mxu0 0.0
    %1871 = vmatpush1.msra.mxu0 %v1825
    %1872 = vmatprep.subr.mxu0 0.0
    %1873 = vmatpush1.msra.mxu0 %v1824
    %1874 = vmatprep.subr.mxu0 0.0
    %1875 = vmatpush2.msra.mxu0 0.0
    %1876 = vmatprep.subr.mxu0 0.0
    %1877 = vmatpush2.msra.mxu0 0.0
    %1878 = vmatprep.subr.mxu0 0.0
    %1879 = vmatpush2.msra.mxu0 0.0
    %1880 = vmatprep.subr.mxu0 0.0
    %1881 = vmatpush2.msra.mxu0 0.0
    %1882 = vmatprep.subr.mxu0 0.0
    %1883 = vmatpush2.msra.mxu0 0.0
    %1884 = vmatprep.subr.mxu0 0.0
    %1885 = vmatpush2.msra.mxu0 0.0
    %1886 = vmatprep.subr.mxu0 0.0
    %1887 = vmatpush2.msra.mxu0 0.0
    %1888 = vmatprep.subr.mxu0 0.0
    %1889 = vmatpush2.msra.mxu0 0.0
    %1890 = vmatprep.subr.mxu0 0.0
    %1891 = vmatpush2.msra.mxu0 0.0
    %1892 = vmatprep.subr.mxu0 0.0
    %1893 = vmatpush2.msra.mxu0 0.0
    %1894 = vmatprep.subr.mxu0 0.0
    %1895 = vmatpush2.msra.mxu0 0.0
    %1896 = vmatprep.subr.mxu0 0.0
    %1897 = vmatpush2.msra.mxu0 0.0
    %1898 = vmatprep.subr.mxu0 0.0
    %1899 = vmatpush2.msra.mxu0 0.0
    %1900 = vmatprep.subr.mxu0 0.0
    %1901 = vmatpush2.msra.mxu0 0.0
    %1902 = vmatprep.subr.mxu0 0.0
    %1903 = vmatpush2.msra.mxu0 0.0
    %1904 = vmatprep.subr.mxu0 0.0
    %1905 = vmatpush2.msra.mxu0 0.0
    %1906 = vmatprep.mubr.f32.mxu0 0.0
    %1907 = vmatmul.mubr.f32.gmra.mxu0 %v1840
    %v1908 = vpop.f32.mrf.mxu0
    %v1909 = vadd.f32 %v1837, %v1908
    %v1910 = vpop.f32.mrf.mxu0
    %1911 = vdwg.mxu0
    %v1912 = vxor.u32 %v1909, 2147483648
    %v1913 = vmul.f32 %v1912, 1.442695
    %v1914 = vpow.pop %v1913
    %v1915 = vadd.f32 %v1914, 1.0
    %v1916 = vrcp.pop %v1915
    %v1917 = vmul.f32 1.0, %v1916
    %1919 = vrot.lane.b32.xlu0 %v1506, 64
    %v1920 = vpop.permute.xlu0 %1919
    %1923 = vrot.lane.b32.xlu0 %v1368, 32
    %v1924 = vpop.permute.xlu0 %1923
    %1927 = vrot.lane.b32.xlu0 %v1500, 64
    %v1928 = vpop.permute.xlu0 %1927
    %1932 = vrot.lane.b32.xlu0 %v1917, 32
    %v1933 = vpop.permute.xlu0 %1932
    %v1935 = vsel %vm295, %v1402, %v1920
    %v1936 = vsel %vm297, %v1935, %v1924
    %v1937 = vsel %vm1629, %v1936, %v1928
    %v1938 = vsel %vm295, %v1661, %v1933
    %vm1939 = vcmask 269312
    %v1940 = vsel %vm1939, %v1938, 0.0
    %1941 = vst [vmem:[#allocation10] sm:$0xff] %v1937
    %1942 = vst [vmem:[#allocation10 + $0x8] sm:$0xff] %v1940
    // Predicated region
    $region54: #{tpu_custom_call.1} parent=1 // pred_check
      _
    $region55: #{tpu_custom_call.1} parent=1 // pred_check_branch
      %1944 = sbr.rel (0) target = $region57
    $region56: #{tpu_custom_call.1} parent=1 // pred_region
      %s1946 = ssub.s32 256, 256
      %1947 = vsyncadd [#allocation5], %s1946
      %s1949 = sshll.u32 [#allocation9], 4
      %s1950 = int_to_ptr.vmem [resolvable:$true] %s1949
      %1952 = dma.vmem_to_hbm [thread:$0]  %s1950, 256, %s10, [#allocation5]
    $region57: #{tpu_custom_call.1} parent=1 // pred_fallthru
      _
    // Predicated region
    $region58: #{tpu_custom_call.1} parent=1 // pred_check
      _
    $region59: #{tpu_custom_call.1} parent=1 // pred_check_branch
      %1954 = sbr.rel (0) target = $region61
    $region60: #{tpu_custom_call.1} parent=1 // pred_region
      %s1956 = ssub.s32 256, 256
      %1957 = vsyncadd [#allocation11], %s1956
      %s1959 = sshll.u32 [#allocation10], 4
      %s1960 = int_to_ptr.vmem [resolvable:$true] %s1959
      %1962 = dma.vmem_to_hbm [thread:$0]  %s1960, 256, %s11, [#allocation11]
    $region61: #{tpu_custom_call.1} parent=1 // pred_fallthru
      _
    // Predicated region
    $region62: #{tpu_custom_call.1} parent=1 // pred_check
      _
    $region63: #{tpu_custom_call.1} parent=1 // pred_check_branch
      %1964 = sbr.rel (0) target = $region65
    $region64: #{tpu_custom_call.1} parent=1 // pred_region
      %1965 = dma.done [#allocation5], 256
    $region65: #{tpu_custom_call.1} parent=1 // pred_fallthru
      _
    // Predicated region
    $region66: #{tpu_custom_call.1} parent=1 // pred_check
      _
    $region67: #{tpu_custom_call.1} parent=1 // pred_check_branch
      %1967 = sbr.rel (0) target = $region69
    $region68: #{tpu_custom_call.1} parent=1 // pred_region
      %1968 = dma.done [#allocation11], 256
    $region69: #{tpu_custom_call.1} parent=1 // pred_fallthru
      _
    %1969 = vsyncpa [#allocation4], 1
    %1970 = vsyncpa [#allocation7], 1
    %1971 = vsyncpa [#allocation5], 1
    %1972 = vsyncpa [#allocation11], 1

</llo_original>
